<compile_context>
chip_gen: v7x
topology: tpu7x:2x2x1
jax: 0.10.0
libtpu: 0.0.40
codegen_flags: <defaults>
</compile_context>

<pallas_src>
import functools

import jax
import jax.numpy as jnp
from jax import lax
from jax.experimental import pallas as pl
from jax.experimental.pallas import tpu as pltpu

_BIG = 1e30  # plain Python float: always a jaxpr literal, never a captured const


def _triplet_hard_kernel(xr_ref, xc_ref, sqr_ref, sqc_ref, yr_ref, yc_ref,
                         o_ref, ap_sc, an_sc, *, margin, mode):
    j = pl.program_id(1)
    nj = pl.num_programs(1)

    # ---- init running accumulators at the start of the column sweep ----
    @pl.when(j == 0)
    def _():
        ap_sc[...] = jnp.full(ap_sc.shape, -_BIG, ap_sc.dtype)
        an_sc[...] = jnp.full(an_sc.shape, _BIG, an_sc.dtype)

    # Gram tile: contract dim 1 of both operands (no transposed copy), f32 acc.
    gram = lax.dot_general(xr_ref[...], xc_ref[...],
                           dimension_numbers=(((1,), (1,)), ((), ())),
                           preferred_element_type=jnp.float32)          # (TM, TN)

    # Mine on the row-norm-hoisted quantity t = ||x_j||^2 - 2 x_i.x_j.
    # Padded columns have sq_col = +1e30 and a label unequal to every real
    # label, so they never win the positive max nor the negative min.
    t = sqc_ref[...] - 2.0 * gram                                        # (TM, TN)
    same = yr_ref[...] == yc_ref[...]                                    # (TM, TN)

    ap_sc[...] = jnp.maximum(
        ap_sc[...], jnp.max(jnp.where(same, t, -_BIG), axis=1, keepdims=True))
    an_sc[...] = jnp.minimum(
        an_sc[...], jnp.min(jnp.where(same, _BIG, t), axis=1, keepdims=True))

    # ---- finalize: add back the per-row norm, sqrt only on (TM,1) vectors ----
    @pl.when(j == nj - 1)
    def _():
        sqr = sqr_ref[...]                                               # (TM, 1)
        d_ap = jnp.sqrt(jnp.maximum(ap_sc[...] + sqr, 1e-12))
        d_an = jnp.sqrt(jnp.maximum(an_sc[...] + sqr, 1e-12))
        diff = d_ap - d_an
        if mode == 'norm':
            per = jnp.maximum(diff + margin, 0.0)
        elif mode == 'softplus':
            # numerically stable softplus
            per = jnp.maximum(diff, 0.0) + jnp.log1p(jnp.exp(-jnp.abs(diff)))
        elif mode == 'applus':
            per = jnp.maximum(diff + margin, 0.0) + d_ap
        else:
            raise ValueError(f"unsupported mode: {mode}")
        o_ref[...] = per


def triplet_hard_loss(X, Y, *, margin=0.3, mode='norm', block=None,
                      gram_in_bf16=False):
    """X: (N, D) float features, Y: (N,) int labels. Returns scalar loss."""
    N, D = X.shape
    X = jnp.asarray(X, dtype=jnp.float32)
    Y = jnp.asarray(Y, dtype=jnp.int32)

    if block is None:
        block = 512 if N > 2048 else 256   # multiples of 256 fill v6e/v7x MXU
    TM = TN = int(block)
    Np = ((N + TM - 1) // TM) * TM
    Dp = ((D + 127) // 128) * 128          # pad contraction dim to full lanes

    Xp = jnp.zeros((Np, Dp), jnp.float32).at[:N, :D].set(X)
    sq = jnp.sum(Xp * Xp, axis=1)          # (Np,) row squared norms (f32, O(N*D))

    # Padding encoding (replaces the validity stream):
    #   * padded columns: sq_col = +1e30 -> never the min negative
    #   * padded labels : min(Y) - 1     -> never equal to a real label (no pos)
    row_valid = jnp.arange(Np) < N
    pad_label = jnp.min(Y) - 1
    Yp = jnp.where(row_valid, jnp.zeros((Np,), jnp.int32).at[:N].set(Y), pad_label)
    sq_col_vals = jnp.where(row_valid, sq, _BIG)

    y_row, y_col = Yp.reshape(Np, 1), Yp.reshape(1, Np)
    sq_row, sq_col = sq.reshape(Np, 1), sq_col_vals.reshape(1, Np)

    # bf16 fast path: cast once in the wrapper so bf16 is what streams from HBM.
    X_stream = Xp.astype(jnp.bfloat16) if gram_in_bf16 else Xp
    stream_item = 2 if gram_in_bf16 else 4

    # VMEM working-set estimate (double-buffered X tiles + (TM,TN) temporaries),
    # with headroom; capped at 64 MiB so it stays inside v7x physical VMEM.
    vmem_need = (2 * (TM + TN) * Dp * stream_item
                 + 6 * TM * TN * 4
                 + 8 * (TM + TN) * 4
                 + 8 * TM * 4)
    vmem_limit = int(min(max(vmem_need * 3 // 2, 32 * 1024 * 1024),
                         64 * 1024 * 1024))

    kernel = functools.partial(_triplet_hard_kernel, margin=float(margin),
                               mode=mode)

    per_row = pl.pallas_call(
        kernel,
        out_shape=jax.ShapeDtypeStruct((Np, 1), jnp.float32),
        grid_spec=pltpu.PrefetchScalarGridSpec(
            num_scalar_prefetch=0,
            grid=(Np // TM, Np // TN),                 # (row tiles, column stream)
            in_specs=[
                pl.BlockSpec((TM, Dp), lambda i, j: (i, 0)),   # X row tile (resident)
                pl.BlockSpec((TN, Dp), lambda i, j: (j, 0)),   # X column tile (streamed)
                pl.BlockSpec((TM, 1), lambda i, j: (i, 0)),    # ||x||^2 rows (finalize only)
                pl.BlockSpec((1, TN), lambda i, j: (0, j)),    # ||x||^2 cols (+1e30 padding)
                pl.BlockSpec((TM, 1), lambda i, j: (i, 0)),    # labels rows
                pl.BlockSpec((1, TN), lambda i, j: (0, j)),    # labels cols
            ],
            out_specs=pl.BlockSpec((TM, 1), lambda i, j: (i, 0)),
            scratch_shapes=[pltpu.VMEM((TM, 1), jnp.float32),   # running max-pos (hoisted d2)
                            pltpu.VMEM((TM, 1), jnp.float32)],  # running min-neg (hoisted d2)
        ),
        compiler_params=pltpu.CompilerParams(
            dimension_semantics=("parallel", "arbitrary"),
            vmem_limit_bytes=vmem_limit),
    )(X_stream, X_stream, sq_row, sq_col, y_row, y_col)

    # Tiny final mean over N per-row losses (padded rows sliced off).
    return jnp.mean(per_row[:N, 0])


def _reference_loss(X, Y, *, margin=0.3, mode='norm'):
    """Plain-JAX reference mirroring the PyTorch forward (PK=True)."""
    X = X.astype(jnp.float32)
    sq = jnp.sum(X * X, axis=-1, keepdims=True)
    d2 = sq + sq.T - 2.0 * (X @ X.T)
    dist = jnp.sqrt(jnp.maximum(d2, 1e-12))
    mask = Y[:, None] == Y[None, :]
    big = 1e30
    dist_ap = jnp.max(jnp.where(mask, dist, -big), axis=1)
    dist_an = jnp.min(jnp.where(mask, big, dist), axis=1)
    diff = dist_ap - dist_an
    if mode == 'norm':
        per = jnp.maximum(diff + margin, 0.0)
    elif mode == 'softplus':
        per = jnp.log1p(jnp.exp(diff))
    else:  # applus
        per = jnp.maximum(diff + margin, 0.0) + dist_ap
    return jnp.mean(per)


if __name__ == "__main__":
    key = jax.random.PRNGKey(0)
    margin = 0.3
    k1, k2 = jax.random.split(key)

    # Small PK-sampled batch: P=4 identities, K=2 images each.
    N1, D1 = 8, 32
    X1 = jax.random.normal(k1, (N1, D1), dtype=jnp.float32)
    Y1 = jnp.array([0, 0, 1, 1, 2, 2, 3, 3], dtype=jnp.int32)

    for m in ('norm', 'softplus', 'applus'):
        loss = jax.block_until_ready(triplet_hard_loss(X1, Y1, margin=margin, mode=m))
        ref = _reference_loss(X1, Y1, margin=margin, mode=m)
        assert jnp.allclose(loss, ref, atol=1e-5, rtol=1e-5), (m, loss, ref)

    # Multi-tile grid: exercises the init/accumulate/finalize column stream.
    N2, D2 = 160, 48
    X2 = jax.random.normal(k2, (N2, D2), dtype=jnp.float32)
    Y2 = (jnp.arange(N2) // 20).astype(jnp.int32)   # 8 identities x 20 images
    loss2 = jax.block_until_ready(
        triplet_hard_loss(X2, Y2, margin=margin, mode='norm', block=128))
    ref2 = _reference_loss(X2, Y2, margin=margin, mode='norm')
    assert jnp.allclose(loss2, ref2, atol=1e-5, rtol=1e-5), (loss2, ref2)

    # bf16-streamed Gram fast path (v6e/v7x MXU): looser tolerance.
    loss_bf16 = jax.block_until_ready(
        triplet_hard_loss(X1, Y1, margin=margin, mode='norm', gram_in_bf16=True))
    ref = _reference_loss(X1, Y1, margin=margin, mode='norm')
    assert jnp.isfinite(loss_bf16) and jnp.allclose(loss_bf16, ref, atol=5e-2, rtol=5e-2), (
        loss_bf16, ref)

    print("KERNEL_OK")
</pallas_src>

<mosaic_0001>
module attributes {stable_mosaic.version = 11 : i64} {
  func.func @_triplet_hard_kernel(%arg0: i32, %arg1: i32, %arg2: memref<256x128xf32, #tpu.memory_space<vmem>>, %arg3: memref<256x128xf32, #tpu.memory_space<vmem>>, %arg4: memref<256x1xf32, #tpu.memory_space<vmem>>, %arg5: memref<1x256xf32, #tpu.memory_space<vmem>>, %arg6: memref<256x1xi32, #tpu.memory_space<vmem>>, %arg7: memref<1x256xi32, #tpu.memory_space<vmem>>, %arg8: memref<256x1xf32, #tpu.memory_space<vmem>>, %arg9: memref<256x1xf32, #tpu.memory_space<vmem>>, %arg10: memref<256x1xf32, #tpu.memory_space<vmem>>) attributes {dimension_semantics = [#tpu.dimension_semantics<parallel>, #tpu.dimension_semantics<arbitrary>], iteration_bounds = array<i64: 1, 1>, scalar_prefetch = 0 : i64, scratch_operands = 2 : i64, tpu.core_type = #tpu.core_type<tc>, window_params = [{transform_indices = @transform_0, window_bounds = array<i64: 256, 128>}, {transform_indices = @transform_1, window_bounds = array<i64: 256, 128>}, {transform_indices = @transform_2, window_bounds = array<i64: 256, 1>}, {transform_indices = @transform_3, window_bounds = array<i64: 1, 256>}, {transform_indices = @transform_4, window_bounds = array<i64: 256, 1>}, {transform_indices = @transform_5, window_bounds = array<i64: 1, 256>}, {transform_indices = @transform_6, window_bounds = array<i64: 256, 1>}]} {
    %c0_i32 = arith.constant 0 : i32
    %0 = arith.cmpi eq, %arg1, %c0_i32 : i32
    %1 = arith.extui %0 : i1 to i32
    %c0_i32_0 = arith.constant 0 : i32
    %2 = arith.cmpi ne, %1, %c0_i32_0 : i32
    scf.if %2 {
      %cst_25 = arith.constant -1.000000e+30 : f32
      %33 = vector.broadcast %cst_25 : f32 to vector<256x1xf32>
      %c0_26 = arith.constant 0 : index
      %c0_27 = arith.constant 0 : index
      %34 = vector.load %arg9[%c0_26, %c0_27] : memref<256x1xf32, #tpu.memory_space<vmem>>, vector<256x1xf32>
      tpu.vector_store %arg9[%c0_26, %c0_27], %33 {strides = array<i32>} : memref<256x1xf32, #tpu.memory_space<vmem>>, vector<256x1xf32>,
      %cst_28 = arith.constant 1.000000e+30 : f32
      %35 = vector.broadcast %cst_28 : f32 to vector<256x1xf32>
      %c0_29 = arith.constant 0 : index
      %c0_30 = arith.constant 0 : index
      %36 = vector.load %arg10[%c0_29, %c0_30] : memref<256x1xf32, #tpu.memory_space<vmem>>, vector<256x1xf32>
      tpu.vector_store %arg10[%c0_29, %c0_30], %35 {strides = array<i32>} : memref<256x1xf32, #tpu.memory_space<vmem>>, vector<256x1xf32>,
    } else {
    }
    %c0 = arith.constant 0 : index
    %c0_1 = arith.constant 0 : index
    %3 = vector.load %arg2[%c0, %c0_1] : memref<256x128xf32, #tpu.memory_space<vmem>>, vector<256x128xf32>
    %c0_2 = arith.constant 0 : index
    %c0_3 = arith.constant 0 : index
    %4 = vector.load %arg3[%c0_2, %c0_3] : memref<256x128xf32, #tpu.memory_space<vmem>>, vector<256x128xf32>
    %cst = arith.constant dense<0.000000e+00> : vector<256x256xf32>
    %5 = tpu.matmul %3, %4, %cst {dimension_numbers = #tpu.dot_dimension_numbers<[1], [1], [0], [0], [0, 0, 1, 0], [], []>} : vector<256x128xf32>, vector<256x128xf32>, vector<256x256xf32> -> vector<256x256xf32>
    %c0_4 = arith.constant 0 : index
    %c0_5 = arith.constant 0 : index
    %6 = vector.load %arg5[%c0_4, %c0_5] : memref<1x256xf32, #tpu.memory_space<vmem>>, vector<1x256xf32>
    %cst_6 = arith.constant 2.000000e+00 : f32
    %7 = vector.broadcast %cst_6 : f32 to vector<256x256xf32>
    %8 = arith.mulf %7, %5 : vector<256x256xf32>
    %9 = vector.broadcast %6 : vector<1x256xf32> to vector<256x256xf32>
    %10 = arith.subf %9, %8 : vector<256x256xf32>
    %c0_7 = arith.constant 0 : index
    %c0_8 = arith.constant 0 : index
    %11 = vector.load %arg6[%c0_7, %c0_8] : memref<256x1xi32, #tpu.memory_space<vmem>>, vector<256x1xi32>
    %c0_9 = arith.constant 0 : index
    %c0_10 = arith.constant 0 : index
    %12 = vector.load %arg7[%c0_9, %c0_10] : memref<1x256xi32, #tpu.memory_space<vmem>>, vector<1x256xi32>
    %13 = vector.broadcast %11 : vector<256x1xi32> to vector<256x256xi32>
    %14 = vector.broadcast %12 : vector<1x256xi32> to vector<256x256xi32>
    %15 = arith.cmpi eq, %13, %14 : vector<256x256xi32>
    %c0_11 = arith.constant 0 : index
    %c0_12 = arith.constant 0 : index
    %16 = vector.load %arg9[%c0_11, %c0_12] : memref<256x1xf32, #tpu.memory_space<vmem>>, vector<256x1xf32>
    %cst_13 = arith.constant -1.000000e+30 : f32
    %17 = vector.broadcast %cst_13 : f32 to vector<256x256xf32>
    %18 = arith.select %15, %10, %17 : vector<256x256xi1>, vector<256x256xf32>
    %cst_14 = arith.constant dense<0xFF800000> : vector<256xf32>
    %19 = vector.multi_reduction <maximumf>, %18, %cst_14 [1] : vector<256x256xf32> to vector<256xf32>
    %20 = vector.shape_cast %19 : vector<256xf32> to vector<256x1xf32>
    %21 = arith.maximumf %16, %20 : vector<256x1xf32>
    %c0_15 = arith.constant 0 : index
    %c0_16 = arith.constant 0 : index
    %22 = vector.load %arg9[%c0_15, %c0_16] : memref<256x1xf32, #tpu.memory_space<vmem>>, vector<256x1xf32>
    tpu.vector_store %arg9[%c0_15, %c0_16], %21 {strides = array<i32>} : memref<256x1xf32, #tpu.memory_space<vmem>>, vector<256x1xf32>,
    %c0_17 = arith.constant 0 : index
    %c0_18 = arith.constant 0 : index
    %23 = vector.load %arg10[%c0_17, %c0_18] : memref<256x1xf32, #tpu.memory_space<vmem>>, vector<256x1xf32>
    %cst_19 = arith.constant 1.000000e+30 : f32
    %24 = vector.broadcast %cst_19 : f32 to vector<256x256xf32>
    %25 = arith.select %15, %24, %10 : vector<256x256xi1>, vector<256x256xf32>
    %cst_20 = arith.constant dense<0x7F800000> : vector<256xf32>
    %26 = vector.multi_reduction <minimumf>, %25, %cst_20 [1] : vector<256x256xf32> to vector<256xf32>
    %27 = vector.shape_cast %26 : vector<256xf32> to vector<256x1xf32>
    %28 = arith.minimumf %23, %27 : vector<256x1xf32>
    %c0_21 = arith.constant 0 : index
    %c0_22 = arith.constant 0 : index
    %29 = vector.load %arg10[%c0_21, %c0_22] : memref<256x1xf32, #tpu.memory_space<vmem>>, vector<256x1xf32>
    tpu.vector_store %arg10[%c0_21, %c0_22], %28 {strides = array<i32>} : memref<256x1xf32, #tpu.memory_space<vmem>>, vector<256x1xf32>,
    %c0_i32_23 = arith.constant 0 : i32
    %30 = arith.cmpi eq, %arg1, %c0_i32_23 : i32
    %31 = arith.extui %30 : i1 to i32
    %c0_i32_24 = arith.constant 0 : i32
    %32 = arith.cmpi ne, %31, %c0_i32_24 : i32
    scf.if %32 {
      %c0_25 = arith.constant 0 : index
      %c0_26 = arith.constant 0 : index
      %33 = vector.load %arg4[%c0_25, %c0_26] : memref<256x1xf32, #tpu.memory_space<vmem>>, vector<256x1xf32>
      %c0_27 = arith.constant 0 : index
      %c0_28 = arith.constant 0 : index
      %34 = vector.load %arg9[%c0_27, %c0_28] : memref<256x1xf32, #tpu.memory_space<vmem>>, vector<256x1xf32>
      %35 = arith.addf %34, %33 : vector<256x1xf32>
      %cst_29 = arith.constant 9.99999996E-13 : f32
      %36 = vector.broadcast %cst_29 : f32 to vector<256x1xf32>
      %37 = arith.maximumf %35, %36 : vector<256x1xf32>
      %38 = math.sqrt %37 : vector<256x1xf32>
      %c0_30 = arith.constant 0 : index
      %c0_31 = arith.constant 0 : index
      %39 = vector.load %arg10[%c0_30, %c0_31] : memref<256x1xf32, #tpu.memory_space<vmem>>, vector<256x1xf32>
      %40 = arith.addf %39, %33 : vector<256x1xf32>
      %cst_32 = arith.constant 9.99999996E-13 : f32
      %41 = vector.broadcast %cst_32 : f32 to vector<256x1xf32>
      %42 = arith.maximumf %40, %41 : vector<256x1xf32>
      %43 = math.sqrt %42 : vector<256x1xf32>
      %44 = arith.subf %38, %43 : vector<256x1xf32>
      %cst_33 = arith.constant 3.000000e-01 : f32
      %45 = vector.broadcast %cst_33 : f32 to vector<256x1xf32>
      %46 = arith.addf %44, %45 : vector<256x1xf32>
      %cst_34 = arith.constant 0.000000e+00 : f32
      %47 = vector.broadcast %cst_34 : f32 to vector<256x1xf32>
      %48 = arith.maximumf %46, %47 : vector<256x1xf32>
      %c0_35 = arith.constant 0 : index
      %c0_36 = arith.constant 0 : index
      %49 = vector.load %arg8[%c0_35, %c0_36] : memref<256x1xf32, #tpu.memory_space<vmem>>, vector<256x1xf32>
      tpu.vector_store %arg8[%c0_35, %c0_36], %48 {strides = array<i32>} : memref<256x1xf32, #tpu.memory_space<vmem>>, vector<256x1xf32>,
    } else {
    }
    return
  }
  func.func @transform_0(%arg0: i32, %arg1: i32) -> (i32, i32) {
    %c0_i32 = arith.constant 0 : i32
    %c0_i32_0 = arith.constant 0 : i32
    return %arg0, %c0_i32 : i32, i32
  }
  func.func @transform_1(%arg0: i32, %arg1: i32) -> (i32, i32) {
    %c0_i32 = arith.constant 0 : i32
    %c0_i32_0 = arith.constant 0 : i32
    return %arg1, %c0_i32 : i32, i32
  }
  func.func @transform_2(%arg0: i32, %arg1: i32) -> (i32, i32) {
    %c0_i32 = arith.constant 0 : i32
    %c0_i32_0 = arith.constant 0 : i32
    return %arg0, %c0_i32 : i32, i32
  }
  func.func @transform_3(%arg0: i32, %arg1: i32) -> (i32, i32) {
    %c0_i32 = arith.constant 0 : i32
    %c0_i32_0 = arith.constant 0 : i32
    return %c0_i32, %arg1 : i32, i32
  }
  func.func @transform_4(%arg0: i32, %arg1: i32) -> (i32, i32) {
    %c0_i32 = arith.constant 0 : i32
    %c0_i32_0 = arith.constant 0 : i32
    return %arg0, %c0_i32 : i32, i32
  }
  func.func @transform_5(%arg0: i32, %arg1: i32) -> (i32, i32) {
    %c0_i32 = arith.constant 0 : i32
    %c0_i32_0 = arith.constant 0 : i32
    return %c0_i32, %arg1 : i32, i32
  }
  func.func @transform_6(%arg0: i32, %arg1: i32) -> (i32, i32) {
    %c0_i32 = arith.constant 0 : i32
    %c0_i32_0 = arith.constant 0 : i32
    return %arg0, %c0_i32 : i32, i32
  }
}

</mosaic_0001>

<llo_original>
// kernel: tpu_custom_call.1
$region0: #{tpu_custom_call.1}
  #allocation0 [shape = 'u32[]', space=smem, size = 0x4, offset = 0x4, fixed_abs, tag = 'smem constant byte address 0x4 - core index']
  #allocation1 [shape = 'u32[144,128]{1,0:T(1,128)}', space=vmem, size = 0x12000, scoped, tag = 'internal scratch']
  #allocation2 [shape = 'f32[256,1]{1,0:T(8,128)}', space=vmem, size = 0x20000, scoped, tag = 'scratch operand']
  #allocation3 [shape = 'f32[256,1]{1,0:T(8,128)}', space=vmem, size = 0x20000, scoped, tag = 'scratch operand']
  %s0 = inlined_call_operand.vmem [shape: f32[256,128], index: 0, kind: input, shape index: {}]
  %s1 = inlined_call_operand.vmem [shape: f32[256,128], index: 1, kind: input, shape index: {}]
  %s2 = inlined_call_operand.vmem [shape: f32[256,1], index: 2, kind: input, shape index: {}]
  %s3 = inlined_call_operand.vmem [shape: f32[1,256], index: 3, kind: input, shape index: {}]
  %s4 = inlined_call_operand.vmem [shape: s32[256,1], index: 4, kind: input, shape index: {}]
  %s5 = inlined_call_operand.vmem [shape: s32[1,256], index: 5, kind: input, shape index: {}]
  %s6 = inlined_call_operand.vmem [shape: f32[256,1], index: 6, kind: output, shape index: {}]
  %s7 = sld [smem:[#allocation0]]
  $region42: #{tpu_custom_call.1} parent=0
    _
  %s9 = ssub.s32 1, %s7
  %s10 = scalar_select 0, %s9, %s7
  // Predicated region
  $region2: #{tpu_custom_call.1} parent=0 // pred_check
    _
  $region3: #{tpu_custom_call.1} parent=0 // pred_check_branch
    %12 = sbr.rel (0) target = $region5
  $region4: #{tpu_custom_call.1} parent=0 // pred_region
    _
  $region5: #{tpu_custom_call.1} parent=0 // pred_fallthru
    _
  // Predicated region
  $region6: #{tpu_custom_call.1} parent=0 // pred_check
    _
  $region7: #{tpu_custom_call.1} parent=0 // pred_check_branch
    %14 = sbr.rel (0) target = $region9
  $region8: #{tpu_custom_call.1} parent=0 // pred_region
    _
  $region9: #{tpu_custom_call.1} parent=0 // pred_fallthru
    _
  // Predicated region
  $region10: #{tpu_custom_call.1} parent=0 // pred_check
    _
  $region11: #{tpu_custom_call.1} parent=0 // pred_check_branch
    %16 = sbr.rel (0) target = $region13
  $region12: #{tpu_custom_call.1} parent=0 // pred_region
    _
  $region13: #{tpu_custom_call.1} parent=0 // pred_fallthru
    _
  // Predicated region
  $region14: #{tpu_custom_call.1} parent=0 // pred_check
    _
  $region15: #{tpu_custom_call.1} parent=0 // pred_check_branch
    %18 = sbr.rel (0) target = $region17
  $region16: #{tpu_custom_call.1} parent=0 // pred_region
    _
  $region17: #{tpu_custom_call.1} parent=0 // pred_fallthru
    _
  // Predicated region
  $region18: #{tpu_custom_call.1} parent=0 // pred_check
    _
  $region19: #{tpu_custom_call.1} parent=0 // pred_check_branch
    %20 = sbr.rel (0) target = $region21
  $region20: #{tpu_custom_call.1} parent=0 // pred_region
    _
  $region21: #{tpu_custom_call.1} parent=0 // pred_fallthru
    _
  // Predicated region
  $region22: #{tpu_custom_call.1} parent=0 // pred_check
    _
  $region23: #{tpu_custom_call.1} parent=0 // pred_check_branch
    %22 = sbr.rel (0) target = $region25
  $region24: #{tpu_custom_call.1} parent=0 // pred_region
    _
  $region25: #{tpu_custom_call.1} parent=0 // pred_fallthru
    _
  %p23 = scmp.eq.s32.totalorder 0, 0
  // Predicated region
  $region26: #{tpu_custom_call.1} parent=0 // pred_check
    %p24 = pneg %p23
  $region27: #{tpu_custom_call.1} parent=0 // pred_check_branch
    %26 = sbr.rel (%p24) target = $region29
  $region28: #{tpu_custom_call.1} parent=0 // pred_region
    %vm27 = vcmask 7168
    %28 = vst.msk [vmem:[#allocation2] sm:$0xff] %vm27, -1e+30
    %29 = vst.msk [vmem:[#allocation2 + $0x8] sm:$0xff] %vm27, -1e+30
    %30 = vst.msk [vmem:[#allocation2 + $0x10] sm:$0xff] %vm27, -1e+30
    %31 = vst.msk [vmem:[#allocation2 + $0x18] sm:$0xff] %vm27, -1e+30
    %32 = vst.msk [vmem:[#allocation2 + $0x20] sm:$0xff] %vm27, -1e+30
    %33 = vst.msk [vmem:[#allocation2 + $0x28] sm:$0xff] %vm27, -1e+30
    %34 = vst.msk [vmem:[#allocation2 + $0x30] sm:$0xff] %vm27, -1e+30
    %35 = vst.msk [vmem:[#allocation2 + $0x38] sm:$0xff] %vm27, -1e+30
    %36 = vst.msk [vmem:[#allocation2 + $0x40] sm:$0xff] %vm27, -1e+30
    %37 = vst.msk [vmem:[#allocation2 + $0x48] sm:$0xff] %vm27, -1e+30
    %38 = vst.msk [vmem:[#allocation2 + $0x50] sm:$0xff] %vm27, -1e+30
    %39 = vst.msk [vmem:[#allocation2 + $0x58] sm:$0xff] %vm27, -1e+30
    %40 = vst.msk [vmem:[#allocation2 + $0x60] sm:$0xff] %vm27, -1e+30
    %41 = vst.msk [vmem:[#allocation2 + $0x68] sm:$0xff] %vm27, -1e+30
    %42 = vst.msk [vmem:[#allocation2 + $0x70] sm:$0xff] %vm27, -1e+30
    %43 = vst.msk [vmem:[#allocation2 + $0x78] sm:$0xff] %vm27, -1e+30
    %44 = vst.msk [vmem:[#allocation2 + $0x80] sm:$0xff] %vm27, -1e+30
    %45 = vst.msk [vmem:[#allocation2 + $0x88] sm:$0xff] %vm27, -1e+30
    %46 = vst.msk [vmem:[#allocation2 + $0x90] sm:$0xff] %vm27, -1e+30
    %47 = vst.msk [vmem:[#allocation2 + $0x98] sm:$0xff] %vm27, -1e+30
    %48 = vst.msk [vmem:[#allocation2 + $0xa0] sm:$0xff] %vm27, -1e+30
    %49 = vst.msk [vmem:[#allocation2 + $0xa8] sm:$0xff] %vm27, -1e+30
    %50 = vst.msk [vmem:[#allocation2 + $0xb0] sm:$0xff] %vm27, -1e+30
    %51 = vst.msk [vmem:[#allocation2 + $0xb8] sm:$0xff] %vm27, -1e+30
    %52 = vst.msk [vmem:[#allocation2 + $0xc0] sm:$0xff] %vm27, -1e+30
    %53 = vst.msk [vmem:[#allocation2 + $0xc8] sm:$0xff] %vm27, -1e+30
    %54 = vst.msk [vmem:[#allocation2 + $0xd0] sm:$0xff] %vm27, -1e+30
    %55 = vst.msk [vmem:[#allocation2 + $0xd8] sm:$0xff] %vm27, -1e+30
    %56 = vst.msk [vmem:[#allocation2 + $0xe0] sm:$0xff] %vm27, -1e+30
    %57 = vst.msk [vmem:[#allocation2 + $0xe8] sm:$0xff] %vm27, -1e+30
    %58 = vst.msk [vmem:[#allocation2 + $0xf0] sm:$0xff] %vm27, -1e+30
    %59 = vst.msk [vmem:[#allocation2 + $0xf8] sm:$0xff] %vm27, -1e+30
    %60 = vst.msk [vmem:[#allocation3] sm:$0xff] %vm27, 1e+30
    %61 = vst.msk [vmem:[#allocation3 + $0x8] sm:$0xff] %vm27, 1e+30
    %62 = vst.msk [vmem:[#allocation3 + $0x10] sm:$0xff] %vm27, 1e+30
    %63 = vst.msk [vmem:[#allocation3 + $0x18] sm:$0xff] %vm27, 1e+30
    %64 = vst.msk [vmem:[#allocation3 + $0x20] sm:$0xff] %vm27, 1e+30
    %65 = vst.msk [vmem:[#allocation3 + $0x28] sm:$0xff] %vm27, 1e+30
    %66 = vst.msk [vmem:[#allocation3 + $0x30] sm:$0xff] %vm27, 1e+30
    %67 = vst.msk [vmem:[#allocation3 + $0x38] sm:$0xff] %vm27, 1e+30
    %68 = vst.msk [vmem:[#allocation3 + $0x40] sm:$0xff] %vm27, 1e+30
    %69 = vst.msk [vmem:[#allocation3 + $0x48] sm:$0xff] %vm27, 1e+30
    %70 = vst.msk [vmem:[#allocation3 + $0x50] sm:$0xff] %vm27, 1e+30
    %71 = vst.msk [vmem:[#allocation3 + $0x58] sm:$0xff] %vm27, 1e+30
    %72 = vst.msk [vmem:[#allocation3 + $0x60] sm:$0xff] %vm27, 1e+30
    %73 = vst.msk [vmem:[#allocation3 + $0x68] sm:$0xff] %vm27, 1e+30
    %74 = vst.msk [vmem:[#allocation3 + $0x70] sm:$0xff] %vm27, 1e+30
    %75 = vst.msk [vmem:[#allocation3 + $0x78] sm:$0xff] %vm27, 1e+30
    %76 = vst.msk [vmem:[#allocation3 + $0x80] sm:$0xff] %vm27, 1e+30
    %77 = vst.msk [vmem:[#allocation3 + $0x88] sm:$0xff] %vm27, 1e+30
    %78 = vst.msk [vmem:[#allocation3 + $0x90] sm:$0xff] %vm27, 1e+30
    %79 = vst.msk [vmem:[#allocation3 + $0x98] sm:$0xff] %vm27, 1e+30
    %80 = vst.msk [vmem:[#allocation3 + $0xa0] sm:$0xff] %vm27, 1e+30
    %81 = vst.msk [vmem:[#allocation3 + $0xa8] sm:$0xff] %vm27, 1e+30
    %82 = vst.msk [vmem:[#allocation3 + $0xb0] sm:$0xff] %vm27, 1e+30
    %83 = vst.msk [vmem:[#allocation3 + $0xb8] sm:$0xff] %vm27, 1e+30
    %84 = vst.msk [vmem:[#allocation3 + $0xc0] sm:$0xff] %vm27, 1e+30
    %85 = vst.msk [vmem:[#allocation3 + $0xc8] sm:$0xff] %vm27, 1e+30
    %86 = vst.msk [vmem:[#allocation3 + $0xd0] sm:$0xff] %vm27, 1e+30
    %87 = vst.msk [vmem:[#allocation3 + $0xd8] sm:$0xff] %vm27, 1e+30
    %88 = vst.msk [vmem:[#allocation3 + $0xe0] sm:$0xff] %vm27, 1e+30
    %89 = vst.msk [vmem:[#allocation3 + $0xe8] sm:$0xff] %vm27, 1e+30
    %90 = vst.msk [vmem:[#allocation3 + $0xf0] sm:$0xff] %vm27, 1e+30
    %91 = vst.msk [vmem:[#allocation3 + $0xf8] sm:$0xff] %vm27, 1e+30
  $region29: #{tpu_custom_call.1} parent=0 // pred_fallthru
    _
  %v92 = vld [vmem:[%s0] sm:$0xff]
  %v93 = vld [vmem:[%s0 + $0x8] sm:$0xff]
  %v94 = vld [vmem:[%s0 + $0x10] sm:$0xff]
  %v95 = vld [vmem:[%s0 + $0x18] sm:$0xff]
  %v96 = vld [vmem:[%s0 + $0x20] sm:$0xff]
  %v97 = vld [vmem:[%s0 + $0x28] sm:$0xff]
  %v98 = vld [vmem:[%s0 + $0x30] sm:$0xff]
  %v99 = vld [vmem:[%s0 + $0x38] sm:$0xff]
  %v100 = vld [vmem:[%s0 + $0x40] sm:$0xff]
  %v101 = vld [vmem:[%s0 + $0x48] sm:$0xff]
  %v102 = vld [vmem:[%s0 + $0x50] sm:$0xff]
  %v103 = vld [vmem:[%s0 + $0x58] sm:$0xff]
  %v104 = vld [vmem:[%s0 + $0x60] sm:$0xff]
  %v105 = vld [vmem:[%s0 + $0x68] sm:$0xff]
  %v106 = vld [vmem:[%s0 + $0x70] sm:$0xff]
  %v107 = vld [vmem:[%s0 + $0x78] sm:$0xff]
  %v108 = vld [vmem:[%s0 + $0x80] sm:$0xff]
  %v109 = vld [vmem:[%s0 + $0x88] sm:$0xff]
  %v110 = vld [vmem:[%s0 + $0x90] sm:$0xff]
  %v111 = vld [vmem:[%s0 + $0x98] sm:$0xff]
  %v112 = vld [vmem:[%s0 + $0xa0] sm:$0xff]
  %v113 = vld [vmem:[%s0 + $0xa8] sm:$0xff]
  %v114 = vld [vmem:[%s0 + $0xb0] sm:$0xff]
  %v115 = vld [vmem:[%s0 + $0xb8] sm:$0xff]
  %v116 = vld [vmem:[%s0 + $0xc0] sm:$0xff]
  %v117 = vld [vmem:[%s0 + $0xc8] sm:$0xff]
  %v118 = vld [vmem:[%s0 + $0xd0] sm:$0xff]
  %v119 = vld [vmem:[%s0 + $0xd8] sm:$0xff]
  %v120 = vld [vmem:[%s0 + $0xe0] sm:$0xff]
  %v121 = vld [vmem:[%s0 + $0xe8] sm:$0xff]
  %v122 = vld [vmem:[%s0 + $0xf0] sm:$0xff]
  %v123 = vld [vmem:[%s0 + $0xf8] sm:$0xff]
  %v124 = vld [vmem:[%s1] sm:$0xff]
  %v125 = vld [vmem:[%s1 + $0x8] sm:$0xff]
  %v126 = vld [vmem:[%s1 + $0x10] sm:$0xff]
  %v127 = vld [vmem:[%s1 + $0x18] sm:$0xff]
  %v128 = vld [vmem:[%s1 + $0x20] sm:$0xff]
  %v129 = vld [vmem:[%s1 + $0x28] sm:$0xff]
  %v130 = vld [vmem:[%s1 + $0x30] sm:$0xff]
  %v131 = vld [vmem:[%s1 + $0x38] sm:$0xff]
  %v132 = vld [vmem:[%s1 + $0x40] sm:$0xff]
  %v133 = vld [vmem:[%s1 + $0x48] sm:$0xff]
  %v134 = vld [vmem:[%s1 + $0x50] sm:$0xff]
  %v135 = vld [vmem:[%s1 + $0x58] sm:$0xff]
  %v136 = vld [vmem:[%s1 + $0x60] sm:$0xff]
  %v137 = vld [vmem:[%s1 + $0x68] sm:$0xff]
  %v138 = vld [vmem:[%s1 + $0x70] sm:$0xff]
  %v139 = vld [vmem:[%s1 + $0x78] sm:$0xff]
  %v140 = vld [vmem:[%s1 + $0x80] sm:$0xff]
  %v141 = vld [vmem:[%s1 + $0x88] sm:$0xff]
  %v142 = vld [vmem:[%s1 + $0x90] sm:$0xff]
  %v143 = vld [vmem:[%s1 + $0x98] sm:$0xff]
  %v144 = vld [vmem:[%s1 + $0xa0] sm:$0xff]
  %v145 = vld [vmem:[%s1 + $0xa8] sm:$0xff]
  %v146 = vld [vmem:[%s1 + $0xb0] sm:$0xff]
  %v147 = vld [vmem:[%s1 + $0xb8] sm:$0xff]
  %v148 = vld [vmem:[%s1 + $0xc0] sm:$0xff]
  %v149 = vld [vmem:[%s1 + $0xc8] sm:$0xff]
  %v150 = vld [vmem:[%s1 + $0xd0] sm:$0xff]
  %v151 = vld [vmem:[%s1 + $0xd8] sm:$0xff]
  %v152 = vld [vmem:[%s1 + $0xe0] sm:$0xff]
  %v153 = vld [vmem:[%s1 + $0xe8] sm:$0xff]
  %v154 = vld [vmem:[%s1 + $0xf0] sm:$0xff]
  %v155 = vld [vmem:[%s1 + $0xf8] sm:$0xff]
  %156 = vmatprep.subr.mxu0 0.0
  %157 = vmatpush1.xpose.msra.mxu0 %v124
  %158 = vmatprep.subr.mxu0 0.0
  %159 = vmatpush1.xpose.msra.mxu0 %v125
  %160 = vmatprep.subr.mxu0 0.0
  %161 = vmatpush1.xpose.msra.mxu0 %v126
  %162 = vmatprep.subr.mxu0 0.0
  %163 = vmatpush1.xpose.msra.mxu0 %v127
  %164 = vmatprep.subr.mxu0 0.0
  %165 = vmatpush1.xpose.msra.mxu0 %v128
  %166 = vmatprep.subr.mxu0 0.0
  %167 = vmatpush1.xpose.msra.mxu0 %v129
  %168 = vmatprep.subr.mxu0 0.0
  %169 = vmatpush1.xpose.msra.mxu0 %v130
  %170 = vmatprep.subr.mxu0 0.0
  %171 = vmatpush1.xpose.msra.mxu0 %v131
  %172 = vmatprep.subr.mxu0 0.0
  %173 = vmatpush1.xpose.msra.mxu0 %v132
  %174 = vmatprep.subr.mxu0 0.0
  %175 = vmatpush1.xpose.msra.mxu0 %v133
  %176 = vmatprep.subr.mxu0 0.0
  %177 = vmatpush1.xpose.msra.mxu0 %v134
  %178 = vmatprep.subr.mxu0 0.0
  %179 = vmatpush1.xpose.msra.mxu0 %v135
  %180 = vmatprep.subr.mxu0 0.0
  %181 = vmatpush1.xpose.msra.mxu0 %v136
  %182 = vmatprep.subr.mxu0 0.0
  %183 = vmatpush1.xpose.msra.mxu0 %v137
  %184 = vmatprep.subr.mxu0 0.0
  %185 = vmatpush1.xpose.msra.mxu0 %v138
  %186 = vmatprep.subr.mxu0 0.0
  %187 = vmatpush1.xpose.msra.mxu0 %v139
  %188 = vmatprep.subr.mxu0 0.0
  %189 = vmatpush1.xpose.msra.mxu0 %v140
  %190 = vmatprep.subr.mxu0 0.0
  %191 = vmatpush1.xpose.msra.mxu0 %v141
  %192 = vmatprep.subr.mxu0 0.0
  %193 = vmatpush1.xpose.msra.mxu0 %v142
  %194 = vmatprep.subr.mxu0 0.0
  %195 = vmatpush1.xpose.msra.mxu0 %v143
  %196 = vmatprep.subr.mxu0 0.0
  %197 = vmatpush1.xpose.msra.mxu0 %v144
  %198 = vmatprep.subr.mxu0 0.0
  %199 = vmatpush1.xpose.msra.mxu0 %v145
  %200 = vmatprep.subr.mxu0 0.0
  %201 = vmatpush1.xpose.msra.mxu0 %v146
  %202 = vmatprep.subr.mxu0 0.0
  %203 = vmatpush1.xpose.msra.mxu0 %v147
  %204 = vmatprep.subr.mxu0 0.0
  %205 = vmatpush1.xpose.msra.mxu0 %v148
  %206 = vmatprep.subr.mxu0 0.0
  %207 = vmatpush1.xpose.msra.mxu0 %v149
  %208 = vmatprep.subr.mxu0 0.0
  %209 = vmatpush1.xpose.msra.mxu0 %v150
  %210 = vmatprep.subr.mxu0 0.0
  %211 = vmatpush1.xpose.msra.mxu0 %v151
  %212 = vmatprep.subr.mxu0 0.0
  %213 = vmatpush1.xpose.msra.mxu0 %v152
  %214 = vmatprep.subr.mxu0 0.0
  %215 = vmatpush1.xpose.msra.mxu0 %v153
  %216 = vmatprep.subr.mxu0 0.0
  %217 = vmatpush1.xpose.msra.mxu0 %v154
  %218 = vmatprep.subr.mxu0 0.0
  %219 = vmatpush1.xpose.msra.mxu0 %v155
  %220 = vmatprep.mubr.f32.mxu0 0.0
  %221 = vmatmul.mubr.f32.gmra.mrb[0].mxu0 %v92
  %v222 = vpop.f32.mrb[0].mxu0
  %v223 = vadd.f32 0.0, %v222
  %v224 = vpop.f32.mrb[0].mxu0
  %v225 = vadd.f32 0.0, %v224
  %226 = vmatprep.mubr.f32.mxu0 0.0
  %227 = vmatmul.mubr.f32.gmra.mrb[0].mxu0 %v93
  %v228 = vpop.f32.mrb[0].mxu0
  %v229 = vadd.f32 0.0, %v228
  %v230 = vpop.f32.mrb[0].mxu0
  %v231 = vadd.f32 0.0, %v230
  %232 = vmatprep.mubr.f32.mxu0 0.0
  %233 = vmatmul.mubr.f32.gmra.mrb[0].mxu0 %v94
  %v234 = vpop.f32.mrb[0].mxu0
  %v235 = vadd.f32 0.0, %v234
  %v236 = vpop.f32.mrb[0].mxu0
  %v237 = vadd.f32 0.0, %v236
  %238 = vmatprep.mubr.f32.mxu0 0.0
  %239 = vmatmul.mubr.f32.gmra.mrb[0].mxu0 %v95
  %v240 = vpop.f32.mrb[0].mxu0
  %v241 = vadd.f32 0.0, %v240
  %v242 = vpop.f32.mrb[0].mxu0
  %v243 = vadd.f32 0.0, %v242
  %244 = vmatprep.mubr.f32.mxu0 0.0
  %245 = vmatmul.mubr.f32.gmra.mrb[0].mxu0 %v96
  %v246 = vpop.f32.mrb[0].mxu0
  %v247 = vadd.f32 0.0, %v246
  %v248 = vpop.f32.mrb[0].mxu0
  %v249 = vadd.f32 0.0, %v248
  %250 = vmatprep.mubr.f32.mxu0 0.0
  %251 = vmatmul.mubr.f32.gmra.mrb[0].mxu0 %v97
  %v252 = vpop.f32.mrb[0].mxu0
  %v253 = vadd.f32 0.0, %v252
  %v254 = vpop.f32.mrb[0].mxu0
  %v255 = vadd.f32 0.0, %v254
  %256 = vmatprep.mubr.f32.mxu0 0.0
  %257 = vmatmul.mubr.f32.gmra.mrb[0].mxu0 %v98
  %v258 = vpop.f32.mrb[0].mxu0
  %v259 = vadd.f32 0.0, %v258
  %v260 = vpop.f32.mrb[0].mxu0
  %v261 = vadd.f32 0.0, %v260
  %262 = vmatprep.mubr.f32.mxu0 0.0
  %263 = vmatmul.mubr.f32.gmra.mrb[0].mxu0 %v99
  %v264 = vpop.f32.mrb[0].mxu0
  %v265 = vadd.f32 0.0, %v264
  %v266 = vpop.f32.mrb[0].mxu0
  %v267 = vadd.f32 0.0, %v266
  %268 = vmatprep.mubr.f32.mxu0 0.0
  %269 = vmatmul.mubr.f32.gmra.mrb[0].mxu0 %v100
  %v270 = vpop.f32.mrb[0].mxu0
  %v271 = vadd.f32 0.0, %v270
  %v272 = vpop.f32.mrb[0].mxu0
  %v273 = vadd.f32 0.0, %v272
  %274 = vmatprep.mubr.f32.mxu0 0.0
  %275 = vmatmul.mubr.f32.gmra.mrb[0].mxu0 %v101
  %v276 = vpop.f32.mrb[0].mxu0
  %v277 = vadd.f32 0.0, %v276
  %v278 = vpop.f32.mrb[0].mxu0
  %v279 = vadd.f32 0.0, %v278
  %280 = vmatprep.mubr.f32.mxu0 0.0
  %281 = vmatmul.mubr.f32.gmra.mrb[0].mxu0 %v102
  %v282 = vpop.f32.mrb[0].mxu0
  %v283 = vadd.f32 0.0, %v282
  %v284 = vpop.f32.mrb[0].mxu0
  %v285 = vadd.f32 0.0, %v284
  %286 = vmatprep.mubr.f32.mxu0 0.0
  %287 = vmatmul.mubr.f32.gmra.mrb[0].mxu0 %v103
  %v288 = vpop.f32.mrb[0].mxu0
  %v289 = vadd.f32 0.0, %v288
  %v290 = vpop.f32.mrb[0].mxu0
  %v291 = vadd.f32 0.0, %v290
  %292 = vmatprep.mubr.f32.mxu0 0.0
  %293 = vmatmul.mubr.f32.gmra.mrb[0].mxu0 %v104
  %v294 = vpop.f32.mrb[0].mxu0
  %v295 = vadd.f32 0.0, %v294
  %v296 = vpop.f32.mrb[0].mxu0
  %v297 = vadd.f32 0.0, %v296
  %298 = vmatprep.mubr.f32.mxu0 0.0
  %299 = vmatmul.mubr.f32.gmra.mrb[0].mxu0 %v105
  %v300 = vpop.f32.mrb[0].mxu0
  %v301 = vadd.f32 0.0, %v300
  %v302 = vpop.f32.mrb[0].mxu0
  %v303 = vadd.f32 0.0, %v302
  %304 = vmatprep.mubr.f32.mxu0 0.0
  %305 = vmatmul.mubr.f32.gmra.mrb[0].mxu0 %v106
  %v306 = vpop.f32.mrb[0].mxu0
  %v307 = vadd.f32 0.0, %v306
  %v308 = vpop.f32.mrb[0].mxu0
  %v309 = vadd.f32 0.0, %v308
  %310 = vmatprep.mubr.f32.mxu0 0.0
  %311 = vmatmul.mubr.f32.gmra.mrb[0].mxu0 %v107
  %v312 = vpop.f32.mrb[0].mxu0
  %v313 = vadd.f32 0.0, %v312
  %v314 = vpop.f32.mrb[0].mxu0
  %v315 = vadd.f32 0.0, %v314
  %316 = vmatprep.mubr.f32.mxu0 0.0
  %317 = vmatmul.mubr.f32.gmra.mrb[0].mxu0 %v108
  %v318 = vpop.f32.mrb[0].mxu0
  %v319 = vadd.f32 0.0, %v318
  %v320 = vpop.f32.mrb[0].mxu0
  %v321 = vadd.f32 0.0, %v320
  %322 = vmatprep.mubr.f32.mxu0 0.0
  %323 = vmatmul.mubr.f32.gmra.mrb[0].mxu0 %v109
  %v324 = vpop.f32.mrb[0].mxu0
  %v325 = vadd.f32 0.0, %v324
  %v326 = vpop.f32.mrb[0].mxu0
  %v327 = vadd.f32 0.0, %v326
  %328 = vmatprep.mubr.f32.mxu0 0.0
  %329 = vmatmul.mubr.f32.gmra.mrb[0].mxu0 %v110
  %v330 = vpop.f32.mrb[0].mxu0
  %v331 = vadd.f32 0.0, %v330
  %v332 = vpop.f32.mrb[0].mxu0
  %v333 = vadd.f32 0.0, %v332
  %334 = vmatprep.mubr.f32.mxu0 0.0
  %335 = vmatmul.mubr.f32.gmra.mrb[0].mxu0 %v111
  %v336 = vpop.f32.mrb[0].mxu0
  %v337 = vadd.f32 0.0, %v336
  %v338 = vpop.f32.mrb[0].mxu0
  %v339 = vadd.f32 0.0, %v338
  %340 = vmatprep.mubr.f32.mxu0 0.0
  %341 = vmatmul.mubr.f32.gmra.mrb[0].mxu0 %v112
  %v342 = vpop.f32.mrb[0].mxu0
  %v343 = vadd.f32 0.0, %v342
  %v344 = vpop.f32.mrb[0].mxu0
  %v345 = vadd.f32 0.0, %v344
  %346 = vmatprep.mubr.f32.mxu0 0.0
  %347 = vmatmul.mubr.f32.gmra.mrb[0].mxu0 %v113
  %v348 = vpop.f32.mrb[0].mxu0
  %v349 = vadd.f32 0.0, %v348
  %v350 = vpop.f32.mrb[0].mxu0
  %v351 = vadd.f32 0.0, %v350
  %352 = vmatprep.mubr.f32.mxu0 0.0
  %353 = vmatmul.mubr.f32.gmra.mrb[0].mxu0 %v114
  %v354 = vpop.f32.mrb[0].mxu0
  %v355 = vadd.f32 0.0, %v354
  %v356 = vpop.f32.mrb[0].mxu0
  %v357 = vadd.f32 0.0, %v356
  %358 = vmatprep.mubr.f32.mxu0 0.0
  %359 = vmatmul.mubr.f32.gmra.mrb[0].mxu0 %v115
  %v360 = vpop.f32.mrb[0].mxu0
  %v361 = vadd.f32 0.0, %v360
  %v362 = vpop.f32.mrb[0].mxu0
  %v363 = vadd.f32 0.0, %v362
  %364 = vmatprep.mubr.f32.mxu0 0.0
  %365 = vmatmul.mubr.f32.gmra.mrb[0].mxu0 %v116
  %v366 = vpop.f32.mrb[0].mxu0
  %v367 = vadd.f32 0.0, %v366
  %v368 = vpop.f32.mrb[0].mxu0
  %v369 = vadd.f32 0.0, %v368
  %370 = vmatprep.mubr.f32.mxu0 0.0
  %371 = vmatmul.mubr.f32.gmra.mrb[0].mxu0 %v117
  %v372 = vpop.f32.mrb[0].mxu0
  %v373 = vadd.f32 0.0, %v372
  %v374 = vpop.f32.mrb[0].mxu0
  %v375 = vadd.f32 0.0, %v374
  %376 = vmatprep.mubr.f32.mxu0 0.0
  %377 = vmatmul.mubr.f32.gmra.mrb[0].mxu0 %v118
  %v378 = vpop.f32.mrb[0].mxu0
  %v379 = vadd.f32 0.0, %v378
  %v380 = vpop.f32.mrb[0].mxu0
  %v381 = vadd.f32 0.0, %v380
  %382 = vmatprep.mubr.f32.mxu0 0.0
  %383 = vmatmul.mubr.f32.gmra.mrb[0].mxu0 %v119
  %v384 = vpop.f32.mrb[0].mxu0
  %v385 = vadd.f32 0.0, %v384
  %v386 = vpop.f32.mrb[0].mxu0
  %v387 = vadd.f32 0.0, %v386
  %388 = vmatprep.mubr.f32.mxu0 0.0
  %389 = vmatmul.mubr.f32.gmra.mrb[0].mxu0 %v120
  %v390 = vpop.f32.mrb[0].mxu0
  %v391 = vadd.f32 0.0, %v390
  %v392 = vpop.f32.mrb[0].mxu0
  %v393 = vadd.f32 0.0, %v392
  %394 = vmatprep.mubr.f32.mxu0 0.0
  %395 = vmatmul.mubr.f32.gmra.mrb[0].mxu0 %v121
  %v396 = vpop.f32.mrb[0].mxu0
  %v397 = vadd.f32 0.0, %v396
  %v398 = vpop.f32.mrb[0].mxu0
  %v399 = vadd.f32 0.0, %v398
  %400 = vmatprep.mubr.f32.mxu0 0.0
  %401 = vmatmul.mubr.f32.gmra.mrb[0].mxu0 %v122
  %v402 = vpop.f32.mrb[0].mxu0
  %v403 = vadd.f32 0.0, %v402
  %v404 = vpop.f32.mrb[0].mxu0
  %v405 = vadd.f32 0.0, %v404
  %406 = vmatprep.mubr.f32.mxu0 0.0
  %407 = vmatmul.mubr.f32.gmra.mrb[0].mxu0 %v123
  %v408 = vpop.f32.mrb[0].mxu0
  %v409 = vadd.f32 0.0, %v408
  %v410 = vpop.f32.mrb[0].mxu0
  %v411 = vadd.f32 0.0, %v410
  %412 = vdwg.mxu0
  %v413 = vld [vmem:[%s3] sm:$0x3]
  %v414 = vmul.f32 %v223, 2.0
  %v415 = vmul.f32 %v225, 2.0
  %v416 = vmul.f32 %v229, 2.0
  %v417 = vmul.f32 %v231, 2.0
  %v418 = vmul.f32 %v235, 2.0
  %v419 = vmul.f32 %v237, 2.0
  %v420 = vmul.f32 %v241, 2.0
  %v421 = vmul.f32 %v243, 2.0
  %v422 = vmul.f32 %v247, 2.0
  %v423 = vmul.f32 %v249, 2.0
  %v424 = vmul.f32 %v253, 2.0
  %v425 = vmul.f32 %v255, 2.0
  %v426 = vmul.f32 %v259, 2.0
  %v427 = vmul.f32 %v261, 2.0
  %v428 = vmul.f32 %v265, 2.0
  %v429 = vmul.f32 %v267, 2.0
  %v430 = vmul.f32 %v271, 2.0
  %v431 = vmul.f32 %v273, 2.0
  %v432 = vmul.f32 %v277, 2.0
  %v433 = vmul.f32 %v279, 2.0
  %v434 = vmul.f32 %v283, 2.0
  %v435 = vmul.f32 %v285, 2.0
  %v436 = vmul.f32 %v289, 2.0
  %v437 = vmul.f32 %v291, 2.0
  %v438 = vmul.f32 %v295, 2.0
  %v439 = vmul.f32 %v297, 2.0
  %v440 = vmul.f32 %v301, 2.0
  %v441 = vmul.f32 %v303, 2.0
  %v442 = vmul.f32 %v307, 2.0
  %v443 = vmul.f32 %v309, 2.0
  %v444 = vmul.f32 %v313, 2.0
  %v445 = vmul.f32 %v315, 2.0
  %v446 = vmul.f32 %v319, 2.0
  %v447 = vmul.f32 %v321, 2.0
  %v448 = vmul.f32 %v325, 2.0
  %v449 = vmul.f32 %v327, 2.0
  %v450 = vmul.f32 %v331, 2.0
  %v451 = vmul.f32 %v333, 2.0
  %v452 = vmul.f32 %v337, 2.0
  %v453 = vmul.f32 %v339, 2.0
  %v454 = vmul.f32 %v343, 2.0
  %v455 = vmul.f32 %v345, 2.0
  %v456 = vmul.f32 %v349, 2.0
  %v457 = vmul.f32 %v351, 2.0
  %v458 = vmul.f32 %v355, 2.0
  %v459 = vmul.f32 %v357, 2.0
  %v460 = vmul.f32 %v361, 2.0
  %v461 = vmul.f32 %v363, 2.0
  %v462 = vmul.f32 %v367, 2.0
  %v463 = vmul.f32 %v369, 2.0
  %v464 = vmul.f32 %v373, 2.0
  %v465 = vmul.f32 %v375, 2.0
  %v466 = vmul.f32 %v379, 2.0
  %v467 = vmul.f32 %v381, 2.0
  %v468 = vmul.f32 %v385, 2.0
  %v469 = vmul.f32 %v387, 2.0
  %v470 = vmul.f32 %v391, 2.0
  %v471 = vmul.f32 %v393, 2.0
  %v472 = vmul.f32 %v397, 2.0
  %v473 = vmul.f32 %v399, 2.0
  %v474 = vmul.f32 %v403, 2.0
  %v475 = vmul.f32 %v405, 2.0
  %v476 = vmul.f32 %v409, 2.0
  %v477 = vmul.f32 %v411, 2.0
  %v479 = vlaneseq
  %v480 = vshrl.u32 %v479, 7
  %v481 = vsub.s32 0, %v480
  %v482 = vrot.slane %v413, %v481
  %v483 = vlaneseq
  %v484 = vshrl.u32 %v483, 7
  %v485 = vsub.s32 1, %v484
  %v486 = vrot.slane %v413, %v485
  %v489 = vsub.f32 %v482, %v414
  %v490 = vsub.f32 %v486, %v415
  %v491 = vsub.f32 %v482, %v416
  %v492 = vsub.f32 %v486, %v417
  %v493 = vsub.f32 %v482, %v418
  %v494 = vsub.f32 %v486, %v419
  %v495 = vsub.f32 %v482, %v420
  %v496 = vsub.f32 %v486, %v421
  %v497 = vsub.f32 %v482, %v422
  %v498 = vsub.f32 %v486, %v423
  %v499 = vsub.f32 %v482, %v424
  %v500 = vsub.f32 %v486, %v425
  %v501 = vsub.f32 %v482, %v426
  %v502 = vsub.f32 %v486, %v427
  %v503 = vsub.f32 %v482, %v428
  %v504 = vsub.f32 %v486, %v429
  %v505 = vsub.f32 %v482, %v430
  %v506 = vsub.f32 %v486, %v431
  %v507 = vsub.f32 %v482, %v432
  %v508 = vsub.f32 %v486, %v433
  %v509 = vsub.f32 %v482, %v434
  %v510 = vsub.f32 %v486, %v435
  %v511 = vsub.f32 %v482, %v436
  %v512 = vsub.f32 %v486, %v437
  %v513 = vsub.f32 %v482, %v438
  %v514 = vsub.f32 %v486, %v439
  %v515 = vsub.f32 %v482, %v440
  %v516 = vsub.f32 %v486, %v441
  %v517 = vsub.f32 %v482, %v442
  %v518 = vsub.f32 %v486, %v443
  %v519 = vsub.f32 %v482, %v444
  %v520 = vsub.f32 %v486, %v445
  %v521 = vsub.f32 %v482, %v446
  %v522 = vsub.f32 %v486, %v447
  %v523 = vsub.f32 %v482, %v448
  %v524 = vsub.f32 %v486, %v449
  %v525 = vsub.f32 %v482, %v450
  %v526 = vsub.f32 %v486, %v451
  %v527 = vsub.f32 %v482, %v452
  %v528 = vsub.f32 %v486, %v453
  %v529 = vsub.f32 %v482, %v454
  %v530 = vsub.f32 %v486, %v455
  %v531 = vsub.f32 %v482, %v456
  %v532 = vsub.f32 %v486, %v457
  %v533 = vsub.f32 %v482, %v458
  %v534 = vsub.f32 %v486, %v459
  %v535 = vsub.f32 %v482, %v460
  %v536 = vsub.f32 %v486, %v461
  %v537 = vsub.f32 %v482, %v462
  %v538 = vsub.f32 %v486, %v463
  %v539 = vsub.f32 %v482, %v464
  %v540 = vsub.f32 %v486, %v465
  %v541 = vsub.f32 %v482, %v466
  %v542 = vsub.f32 %v486, %v467
  %v543 = vsub.f32 %v482, %v468
  %v544 = vsub.f32 %v486, %v469
  %v545 = vsub.f32 %v482, %v470
  %v546 = vsub.f32 %v486, %v471
  %v547 = vsub.f32 %v482, %v472
  %v548 = vsub.f32 %v486, %v473
  %v549 = vsub.f32 %v482, %v474
  %v550 = vsub.f32 %v486, %v475
  %v551 = vsub.f32 %v482, %v476
  %v552 = vsub.f32 %v486, %v477
  %v553 = vld [vmem:[%s4] sm:$0xff]
  %v554 = vld [vmem:[%s4 + $0x8] sm:$0xff]
  %v555 = vld [vmem:[%s4 + $0x10] sm:$0xff]
  %v556 = vld [vmem:[%s4 + $0x18] sm:$0xff]
  %v557 = vld [vmem:[%s4 + $0x20] sm:$0xff]
  %v558 = vld [vmem:[%s4 + $0x28] sm:$0xff]
  %v559 = vld [vmem:[%s4 + $0x30] sm:$0xff]
  %v560 = vld [vmem:[%s4 + $0x38] sm:$0xff]
  %v561 = vld [vmem:[%s4 + $0x40] sm:$0xff]
  %v562 = vld [vmem:[%s4 + $0x48] sm:$0xff]
  %v563 = vld [vmem:[%s4 + $0x50] sm:$0xff]
  %v564 = vld [vmem:[%s4 + $0x58] sm:$0xff]
  %v565 = vld [vmem:[%s4 + $0x60] sm:$0xff]
  %v566 = vld [vmem:[%s4 + $0x68] sm:$0xff]
  %v567 = vld [vmem:[%s4 + $0x70] sm:$0xff]
  %v568 = vld [vmem:[%s4 + $0x78] sm:$0xff]
  %v569 = vld [vmem:[%s4 + $0x80] sm:$0xff]
  %v570 = vld [vmem:[%s4 + $0x88] sm:$0xff]
  %v571 = vld [vmem:[%s4 + $0x90] sm:$0xff]
  %v572 = vld [vmem:[%s4 + $0x98] sm:$0xff]
  %v573 = vld [vmem:[%s4 + $0xa0] sm:$0xff]
  %v574 = vld [vmem:[%s4 + $0xa8] sm:$0xff]
  %v575 = vld [vmem:[%s4 + $0xb0] sm:$0xff]
  %v576 = vld [vmem:[%s4 + $0xb8] sm:$0xff]
  %v577 = vld [vmem:[%s4 + $0xc0] sm:$0xff]
  %v578 = vld [vmem:[%s4 + $0xc8] sm:$0xff]
  %v579 = vld [vmem:[%s4 + $0xd0] sm:$0xff]
  %v580 = vld [vmem:[%s4 + $0xd8] sm:$0xff]
  %v581 = vld [vmem:[%s4 + $0xe0] sm:$0xff]
  %v582 = vld [vmem:[%s4 + $0xe8] sm:$0xff]
  %v583 = vld [vmem:[%s4 + $0xf0] sm:$0xff]
  %v584 = vld [vmem:[%s4 + $0xf8] sm:$0xff]
  %v585 = vld [vmem:[%s5] sm:$0x3]
  %586 = vset.pattern.permute.xlu0 0
  %587 = vperm.xlu0 %586, %v553
  %v588 = vpop.permute.xlu0 %587
  %589 = vset.pattern.permute.xlu0 0
  %590 = vperm.xlu0 %589, %v554
  %v591 = vpop.permute.xlu0 %590
  %592 = vset.pattern.permute.xlu0 0
  %593 = vperm.xlu0 %592, %v555
  %v594 = vpop.permute.xlu0 %593
  %595 = vset.pattern.permute.xlu0 0
  %596 = vperm.xlu0 %595, %v556
  %v597 = vpop.permute.xlu0 %596
  %598 = vset.pattern.permute.xlu0 0
  %599 = vperm.xlu0 %598, %v557
  %v600 = vpop.permute.xlu0 %599
  %601 = vset.pattern.permute.xlu0 0
  %602 = vperm.xlu0 %601, %v558
  %v603 = vpop.permute.xlu0 %602
  %604 = vset.pattern.permute.xlu0 0
  %605 = vperm.xlu0 %604, %v559
  %v606 = vpop.permute.xlu0 %605
  %607 = vset.pattern.permute.xlu0 0
  %608 = vperm.xlu0 %607, %v560
  %v609 = vpop.permute.xlu0 %608
  %610 = vset.pattern.permute.xlu0 0
  %611 = vperm.xlu0 %610, %v561
  %v612 = vpop.permute.xlu0 %611
  %613 = vset.pattern.permute.xlu0 0
  %614 = vperm.xlu0 %613, %v562
  %v615 = vpop.permute.xlu0 %614
  %616 = vset.pattern.permute.xlu0 0
  %617 = vperm.xlu0 %616, %v563
  %v618 = vpop.permute.xlu0 %617
  %619 = vset.pattern.permute.xlu0 0
  %620 = vperm.xlu0 %619, %v564
  %v621 = vpop.permute.xlu0 %620
  %622 = vset.pattern.permute.xlu0 0
  %623 = vperm.xlu0 %622, %v565
  %v624 = vpop.permute.xlu0 %623
  %625 = vset.pattern.permute.xlu0 0
  %626 = vperm.xlu0 %625, %v566
  %v627 = vpop.permute.xlu0 %626
  %628 = vset.pattern.permute.xlu0 0
  %629 = vperm.xlu0 %628, %v567
  %v630 = vpop.permute.xlu0 %629
  %631 = vset.pattern.permute.xlu0 0
  %632 = vperm.xlu0 %631, %v568
  %v633 = vpop.permute.xlu0 %632
  %634 = vset.pattern.permute.xlu0 0
  %635 = vperm.xlu0 %634, %v569
  %v636 = vpop.permute.xlu0 %635
  %637 = vset.pattern.permute.xlu0 0
  %638 = vperm.xlu0 %637, %v570
  %v639 = vpop.permute.xlu0 %638
  %640 = vset.pattern.permute.xlu0 0
  %641 = vperm.xlu0 %640, %v571
  %v642 = vpop.permute.xlu0 %641
  %643 = vset.pattern.permute.xlu0 0
  %644 = vperm.xlu0 %643, %v572
  %v645 = vpop.permute.xlu0 %644
  %646 = vset.pattern.permute.xlu0 0
  %647 = vperm.xlu0 %646, %v573
  %v648 = vpop.permute.xlu0 %647
  %649 = vset.pattern.permute.xlu0 0
  %650 = vperm.xlu0 %649, %v574
  %v651 = vpop.permute.xlu0 %650
  %652 = vset.pattern.permute.xlu0 0
  %653 = vperm.xlu0 %652, %v575
  %v654 = vpop.permute.xlu0 %653
  %655 = vset.pattern.permute.xlu0 0
  %656 = vperm.xlu0 %655, %v576
  %v657 = vpop.permute.xlu0 %656
  %658 = vset.pattern.permute.xlu0 0
  %659 = vperm.xlu0 %658, %v577
  %v660 = vpop.permute.xlu0 %659
  %661 = vset.pattern.permute.xlu0 0
  %662 = vperm.xlu0 %661, %v578
  %v663 = vpop.permute.xlu0 %662
  %664 = vset.pattern.permute.xlu0 0
  %665 = vperm.xlu0 %664, %v579
  %v666 = vpop.permute.xlu0 %665
  %667 = vset.pattern.permute.xlu0 0
  %668 = vperm.xlu0 %667, %v580
  %v669 = vpop.permute.xlu0 %668
  %670 = vset.pattern.permute.xlu0 0
  %671 = vperm.xlu0 %670, %v581
  %v672 = vpop.permute.xlu0 %671
  %673 = vset.pattern.permute.xlu0 0
  %674 = vperm.xlu0 %673, %v582
  %v675 = vpop.permute.xlu0 %674
  %676 = vset.pattern.permute.xlu0 0
  %677 = vperm.xlu0 %676, %v583
  %v678 = vpop.permute.xlu0 %677
  %679 = vset.pattern.permute.xlu0 0
  %680 = vperm.xlu0 %679, %v584
  %v681 = vpop.permute.xlu0 %680
  %v682 = vlaneseq
  %v683 = vshrl.u32 %v682, 7
  %v684 = vsub.s32 0, %v683
  %v685 = vrot.slane %v585, %v684
  %v686 = vlaneseq
  %v687 = vshrl.u32 %v686, 7
  %v688 = vsub.s32 1, %v687
  %v689 = vrot.slane %v585, %v688
  %vm690 = vcmp.eq.s32.totalorder %v588, %v685
  %vm691 = vcmp.eq.s32.totalorder %v588, %v689
  %vm692 = vcmp.eq.s32.totalorder %v591, %v685
  %vm693 = vcmp.eq.s32.totalorder %v591, %v689
  %vm694 = vcmp.eq.s32.totalorder %v594, %v685
  %vm695 = vcmp.eq.s32.totalorder %v594, %v689
  %vm696 = vcmp.eq.s32.totalorder %v597, %v685
  %vm697 = vcmp.eq.s32.totalorder %v597, %v689
  %vm698 = vcmp.eq.s32.totalorder %v600, %v685
  %vm699 = vcmp.eq.s32.totalorder %v600, %v689
  %vm700 = vcmp.eq.s32.totalorder %v603, %v685
  %vm701 = vcmp.eq.s32.totalorder %v603, %v689
  %vm702 = vcmp.eq.s32.totalorder %v606, %v685
  %vm703 = vcmp.eq.s32.totalorder %v606, %v689
  %vm704 = vcmp.eq.s32.totalorder %v609, %v685
  %vm705 = vcmp.eq.s32.totalorder %v609, %v689
  %vm706 = vcmp.eq.s32.totalorder %v612, %v685
  %vm707 = vcmp.eq.s32.totalorder %v612, %v689
  %vm708 = vcmp.eq.s32.totalorder %v615, %v685
  %vm709 = vcmp.eq.s32.totalorder %v615, %v689
  %vm710 = vcmp.eq.s32.totalorder %v618, %v685
  %vm711 = vcmp.eq.s32.totalorder %v618, %v689
  %vm712 = vcmp.eq.s32.totalorder %v621, %v685
  %vm713 = vcmp.eq.s32.totalorder %v621, %v689
  %vm714 = vcmp.eq.s32.totalorder %v624, %v685
  %vm715 = vcmp.eq.s32.totalorder %v624, %v689
  %vm716 = vcmp.eq.s32.totalorder %v627, %v685
  %vm717 = vcmp.eq.s32.totalorder %v627, %v689
  %vm718 = vcmp.eq.s32.totalorder %v630, %v685
  %vm719 = vcmp.eq.s32.totalorder %v630, %v689
  %vm720 = vcmp.eq.s32.totalorder %v633, %v685
  %vm721 = vcmp.eq.s32.totalorder %v633, %v689
  %vm722 = vcmp.eq.s32.totalorder %v636, %v685
  %vm723 = vcmp.eq.s32.totalorder %v636, %v689
  %vm724 = vcmp.eq.s32.totalorder %v639, %v685
  %vm725 = vcmp.eq.s32.totalorder %v639, %v689
  %vm726 = vcmp.eq.s32.totalorder %v642, %v685
  %vm727 = vcmp.eq.s32.totalorder %v642, %v689
  %vm728 = vcmp.eq.s32.totalorder %v645, %v685
  %vm729 = vcmp.eq.s32.totalorder %v645, %v689
  %vm730 = vcmp.eq.s32.totalorder %v648, %v685
  %vm731 = vcmp.eq.s32.totalorder %v648, %v689
  %vm732 = vcmp.eq.s32.totalorder %v651, %v685
  %vm733 = vcmp.eq.s32.totalorder %v651, %v689
  %vm734 = vcmp.eq.s32.totalorder %v654, %v685
  %vm735 = vcmp.eq.s32.totalorder %v654, %v689
  %vm736 = vcmp.eq.s32.totalorder %v657, %v685
  %vm737 = vcmp.eq.s32.totalorder %v657, %v689
  %vm738 = vcmp.eq.s32.totalorder %v660, %v685
  %vm739 = vcmp.eq.s32.totalorder %v660, %v689
  %vm740 = vcmp.eq.s32.totalorder %v663, %v685
  %vm741 = vcmp.eq.s32.totalorder %v663, %v689
  %vm742 = vcmp.eq.s32.totalorder %v666, %v685
  %vm743 = vcmp.eq.s32.totalorder %v666, %v689
  %vm744 = vcmp.eq.s32.totalorder %v669, %v685
  %vm745 = vcmp.eq.s32.totalorder %v669, %v689
  %vm746 = vcmp.eq.s32.totalorder %v672, %v685
  %vm747 = vcmp.eq.s32.totalorder %v672, %v689
  %vm748 = vcmp.eq.s32.totalorder %v675, %v685
  %vm749 = vcmp.eq.s32.totalorder %v675, %v689
  %vm750 = vcmp.eq.s32.totalorder %v678, %v685
  %vm751 = vcmp.eq.s32.totalorder %v678, %v689
  %vm752 = vcmp.eq.s32.totalorder %v681, %v685
  %vm753 = vcmp.eq.s32.totalorder %v681, %v689
  %v754 = vld [vmem:[#allocation2] sm:$0xff]
  %v755 = vld [vmem:[#allocation2 + $0x8] sm:$0xff]
  %v756 = vld [vmem:[#allocation2 + $0x10] sm:$0xff]
  %v757 = vld [vmem:[#allocation2 + $0x18] sm:$0xff]
  %v758 = vld [vmem:[#allocation2 + $0x20] sm:$0xff]
  %v759 = vld [vmem:[#allocation2 + $0x28] sm:$0xff]
  %v760 = vld [vmem:[#allocation2 + $0x30] sm:$0xff]
  %v761 = vld [vmem:[#allocation2 + $0x38] sm:$0xff]
  %v762 = vld [vmem:[#allocation2 + $0x40] sm:$0xff]
  %v763 = vld [vmem:[#allocation2 + $0x48] sm:$0xff]
  %v764 = vld [vmem:[#allocation2 + $0x50] sm:$0xff]
  %v765 = vld [vmem:[#allocation2 + $0x58] sm:$0xff]
  %v766 = vld [vmem:[#allocation2 + $0x60] sm:$0xff]
  %v767 = vld [vmem:[#allocation2 + $0x68] sm:$0xff]
  %v768 = vld [vmem:[#allocation2 + $0x70] sm:$0xff]
  %v769 = vld [vmem:[#allocation2 + $0x78] sm:$0xff]
  %v770 = vld [vmem:[#allocation2 + $0x80] sm:$0xff]
  %v771 = vld [vmem:[#allocation2 + $0x88] sm:$0xff]
  %v772 = vld [vmem:[#allocation2 + $0x90] sm:$0xff]
  %v773 = vld [vmem:[#allocation2 + $0x98] sm:$0xff]
  %v774 = vld [vmem:[#allocation2 + $0xa0] sm:$0xff]
  %v775 = vld [vmem:[#allocation2 + $0xa8] sm:$0xff]
  %v776 = vld [vmem:[#allocation2 + $0xb0] sm:$0xff]
  %v777 = vld [vmem:[#allocation2 + $0xb8] sm:$0xff]
  %v778 = vld [vmem:[#allocation2 + $0xc0] sm:$0xff]
  %v779 = vld [vmem:[#allocation2 + $0xc8] sm:$0xff]
  %v780 = vld [vmem:[#allocation2 + $0xd0] sm:$0xff]
  %v781 = vld [vmem:[#allocation2 + $0xd8] sm:$0xff]
  %v782 = vld [vmem:[#allocation2 + $0xe0] sm:$0xff]
  %v783 = vld [vmem:[#allocation2 + $0xe8] sm:$0xff]
  %v784 = vld [vmem:[#allocation2 + $0xf0] sm:$0xff]
  %v785 = vld [vmem:[#allocation2 + $0xf8] sm:$0xff]
  %v786 = vsel %vm690, %v489, -1e+30
  %v787 = vsel %vm691, %v490, -1e+30
  %v788 = vsel %vm692, %v491, -1e+30
  %v789 = vsel %vm693, %v492, -1e+30
  %v790 = vsel %vm694, %v493, -1e+30
  %v791 = vsel %vm695, %v494, -1e+30
  %v792 = vsel %vm696, %v495, -1e+30
  %v793 = vsel %vm697, %v496, -1e+30
  %v794 = vsel %vm698, %v497, -1e+30
  %v795 = vsel %vm699, %v498, -1e+30
  %v796 = vsel %vm700, %v499, -1e+30
  %v797 = vsel %vm701, %v500, -1e+30
  %v798 = vsel %vm702, %v501, -1e+30
  %v799 = vsel %vm703, %v502, -1e+30
  %v800 = vsel %vm704, %v503, -1e+30
  %v801 = vsel %vm705, %v504, -1e+30
  %v802 = vsel %vm706, %v505, -1e+30
  %v803 = vsel %vm707, %v506, -1e+30
  %v804 = vsel %vm708, %v507, -1e+30
  %v805 = vsel %vm709, %v508, -1e+30
  %v806 = vsel %vm710, %v509, -1e+30
  %v807 = vsel %vm711, %v510, -1e+30
  %v808 = vsel %vm712, %v511, -1e+30
  %v809 = vsel %vm713, %v512, -1e+30
  %v810 = vsel %vm714, %v513, -1e+30
  %v811 = vsel %vm715, %v514, -1e+30
  %v812 = vsel %vm716, %v515, -1e+30
  %v813 = vsel %vm717, %v516, -1e+30
  %v814 = vsel %vm718, %v517, -1e+30
  %v815 = vsel %vm719, %v518, -1e+30
  %v816 = vsel %vm720, %v519, -1e+30
  %v817 = vsel %vm721, %v520, -1e+30
  %v818 = vsel %vm722, %v521, -1e+30
  %v819 = vsel %vm723, %v522, -1e+30
  %v820 = vsel %vm724, %v523, -1e+30
  %v821 = vsel %vm725, %v524, -1e+30
  %v822 = vsel %vm726, %v525, -1e+30
  %v823 = vsel %vm727, %v526, -1e+30
  %v824 = vsel %vm728, %v527, -1e+30
  %v825 = vsel %vm729, %v528, -1e+30
  %v826 = vsel %vm730, %v529, -1e+30
  %v827 = vsel %vm731, %v530, -1e+30
  %v828 = vsel %vm732, %v531, -1e+30
  %v829 = vsel %vm733, %v532, -1e+30
  %v830 = vsel %vm734, %v533, -1e+30
  %v831 = vsel %vm735, %v534, -1e+30
  %v832 = vsel %vm736, %v535, -1e+30
  %v833 = vsel %vm737, %v536, -1e+30
  %v834 = vsel %vm738, %v537, -1e+30
  %v835 = vsel %vm739, %v538, -1e+30
  %v836 = vsel %vm740, %v539, -1e+30
  %v837 = vsel %vm741, %v540, -1e+30
  %v838 = vsel %vm742, %v541, -1e+30
  %v839 = vsel %vm743, %v542, -1e+30
  %v840 = vsel %vm744, %v543, -1e+30
  %v841 = vsel %vm745, %v544, -1e+30
  %v842 = vsel %vm746, %v545, -1e+30
  %v843 = vsel %vm747, %v546, -1e+30
  %v844 = vsel %vm748, %v547, -1e+30
  %v845 = vsel %vm749, %v548, -1e+30
  %v846 = vsel %vm750, %v549, -1e+30
  %v847 = vsel %vm751, %v550, -1e+30
  %v848 = vsel %vm752, %v551, -1e+30
  %v849 = vsel %vm753, %v552, -1e+30
  %v850 = vmax.f32 %v786, %v787
  %851 = vmax.xlane.f32.xlu0 %v850
  %v852 = vpop.xlane.xlu0 %851
  %v853 = vmax.f32 %v788, %v789
  %854 = vmax.xlane.f32.xlu0 %v853
  %v855 = vpop.xlane.xlu0 %854
  %v856 = vmax.f32 %v790, %v791
  %857 = vmax.xlane.f32.xlu0 %v856
  %v858 = vpop.xlane.xlu0 %857
  %v859 = vmax.f32 %v792, %v793
  %860 = vmax.xlane.f32.xlu0 %v859
  %v861 = vpop.xlane.xlu0 %860
  %v862 = vmax.f32 %v794, %v795
  %863 = vmax.xlane.f32.xlu0 %v862
  %v864 = vpop.xlane.xlu0 %863
  %v865 = vmax.f32 %v796, %v797
  %866 = vmax.xlane.f32.xlu0 %v865
  %v867 = vpop.xlane.xlu0 %866
  %v868 = vmax.f32 %v798, %v799
  %869 = vmax.xlane.f32.xlu0 %v868
  %v870 = vpop.xlane.xlu0 %869
  %v871 = vmax.f32 %v800, %v801
  %872 = vmax.xlane.f32.xlu0 %v871
  %v873 = vpop.xlane.xlu0 %872
  %v874 = vmax.f32 %v802, %v803
  %875 = vmax.xlane.f32.xlu0 %v874
  %v876 = vpop.xlane.xlu0 %875
  %v877 = vmax.f32 %v804, %v805
  %878 = vmax.xlane.f32.xlu0 %v877
  %v879 = vpop.xlane.xlu0 %878
  %v880 = vmax.f32 %v806, %v807
  %881 = vmax.xlane.f32.xlu0 %v880
  %v882 = vpop.xlane.xlu0 %881
  %v883 = vmax.f32 %v808, %v809
  %884 = vmax.xlane.f32.xlu0 %v883
  %v885 = vpop.xlane.xlu0 %884
  %v886 = vmax.f32 %v810, %v811
  %887 = vmax.xlane.f32.xlu0 %v886
  %v888 = vpop.xlane.xlu0 %887
  %v889 = vmax.f32 %v812, %v813
  %890 = vmax.xlane.f32.xlu0 %v889
  %v891 = vpop.xlane.xlu0 %890
  %v892 = vmax.f32 %v814, %v815
  %893 = vmax.xlane.f32.xlu0 %v892
  %v894 = vpop.xlane.xlu0 %893
  %v895 = vmax.f32 %v816, %v817
  %896 = vmax.xlane.f32.xlu0 %v895
  %v897 = vpop.xlane.xlu0 %896
  %v898 = vmax.f32 %v818, %v819
  %899 = vmax.xlane.f32.xlu0 %v898
  %v900 = vpop.xlane.xlu0 %899
  %v901 = vmax.f32 %v820, %v821
  %902 = vmax.xlane.f32.xlu0 %v901
  %v903 = vpop.xlane.xlu0 %902
  %v904 = vmax.f32 %v822, %v823
  %905 = vmax.xlane.f32.xlu0 %v904
  %v906 = vpop.xlane.xlu0 %905
  %v907 = vmax.f32 %v824, %v825
  %908 = vmax.xlane.f32.xlu0 %v907
  %v909 = vpop.xlane.xlu0 %908
  %v910 = vmax.f32 %v826, %v827
  %911 = vmax.xlane.f32.xlu0 %v910
  %v912 = vpop.xlane.xlu0 %911
  %v913 = vmax.f32 %v828, %v829
  %914 = vmax.xlane.f32.xlu0 %v913
  %v915 = vpop.xlane.xlu0 %914
  %v916 = vmax.f32 %v830, %v831
  %917 = vmax.xlane.f32.xlu0 %v916
  %v918 = vpop.xlane.xlu0 %917
  %v919 = vmax.f32 %v832, %v833
  %920 = vmax.xlane.f32.xlu0 %v919
  %v921 = vpop.xlane.xlu0 %920
  %v922 = vmax.f32 %v834, %v835
  %923 = vmax.xlane.f32.xlu0 %v922
  %v924 = vpop.xlane.xlu0 %923
  %v925 = vmax.f32 %v836, %v837
  %926 = vmax.xlane.f32.xlu0 %v925
  %v927 = vpop.xlane.xlu0 %926
  %v928 = vmax.f32 %v838, %v839
  %929 = vmax.xlane.f32.xlu0 %v928
  %v930 = vpop.xlane.xlu0 %929
  %v931 = vmax.f32 %v840, %v841
  %932 = vmax.xlane.f32.xlu0 %v931
  %v933 = vpop.xlane.xlu0 %932
  %v934 = vmax.f32 %v842, %v843
  %935 = vmax.xlane.f32.xlu0 %v934
  %v936 = vpop.xlane.xlu0 %935
  %v937 = vmax.f32 %v844, %v845
  %938 = vmax.xlane.f32.xlu0 %v937
  %v939 = vpop.xlane.xlu0 %938
  %v940 = vmax.f32 %v846, %v847
  %941 = vmax.xlane.f32.xlu0 %v940
  %v942 = vpop.xlane.xlu0 %941
  %v943 = vmax.f32 %v848, %v849
  %944 = vmax.xlane.f32.xlu0 %v943
  %v945 = vpop.xlane.xlu0 %944
  %v946 = vmax.f32 %v754, %v852
  %v947 = vmax.f32 %v755, %v855
  %v948 = vmax.f32 %v756, %v858
  %v949 = vmax.f32 %v757, %v861
  %v950 = vmax.f32 %v758, %v864
  %v951 = vmax.f32 %v759, %v867
  %v952 = vmax.f32 %v760, %v870
  %v953 = vmax.f32 %v761, %v873
  %v954 = vmax.f32 %v762, %v876
  %v955 = vmax.f32 %v763, %v879
  %v956 = vmax.f32 %v764, %v882
  %v957 = vmax.f32 %v765, %v885
  %v958 = vmax.f32 %v766, %v888
  %v959 = vmax.f32 %v767, %v891
  %v960 = vmax.f32 %v768, %v894
  %v961 = vmax.f32 %v769, %v897
  %v962 = vmax.f32 %v770, %v900
  %v963 = vmax.f32 %v771, %v903
  %v964 = vmax.f32 %v772, %v906
  %v965 = vmax.f32 %v773, %v909
  %v966 = vmax.f32 %v774, %v912
  %v967 = vmax.f32 %v775, %v915
  %v968 = vmax.f32 %v776, %v918
  %v969 = vmax.f32 %v777, %v921
  %v970 = vmax.f32 %v778, %v924
  %v971 = vmax.f32 %v779, %v927
  %v972 = vmax.f32 %v780, %v930
  %v973 = vmax.f32 %v781, %v933
  %v974 = vmax.f32 %v782, %v936
  %v975 = vmax.f32 %v783, %v939
  %v976 = vmax.f32 %v784, %v942
  %v977 = vmax.f32 %v785, %v945
  %vm978 = vcmask 7168
  %979 = vst.msk [vmem:[#allocation2] sm:$0xff] %vm978, %v946
  %980 = vst.msk [vmem:[#allocation2 + $0x8] sm:$0xff] %vm978, %v947
  %981 = vst.msk [vmem:[#allocation2 + $0x10] sm:$0xff] %vm978, %v948
  %982 = vst.msk [vmem:[#allocation2 + $0x18] sm:$0xff] %vm978, %v949
  %983 = vst.msk [vmem:[#allocation2 + $0x20] sm:$0xff] %vm978, %v950
  %984 = vst.msk [vmem:[#allocation2 + $0x28] sm:$0xff] %vm978, %v951
  %985 = vst.msk [vmem:[#allocation2 + $0x30] sm:$0xff] %vm978, %v952
  %986 = vst.msk [vmem:[#allocation2 + $0x38] sm:$0xff] %vm978, %v953
  %987 = vst.msk [vmem:[#allocation2 + $0x40] sm:$0xff] %vm978, %v954
  %988 = vst.msk [vmem:[#allocation2 + $0x48] sm:$0xff] %vm978, %v955
  %989 = vst.msk [vmem:[#allocation2 + $0x50] sm:$0xff] %vm978, %v956
  %990 = vst.msk [vmem:[#allocation2 + $0x58] sm:$0xff] %vm978, %v957
  %991 = vst.msk [vmem:[#allocation2 + $0x60] sm:$0xff] %vm978, %v958
  %992 = vst.msk [vmem:[#allocation2 + $0x68] sm:$0xff] %vm978, %v959
  %993 = vst.msk [vmem:[#allocation2 + $0x70] sm:$0xff] %vm978, %v960
  %994 = vst.msk [vmem:[#allocation2 + $0x78] sm:$0xff] %vm978, %v961
  %995 = vst.msk [vmem:[#allocation2 + $0x80] sm:$0xff] %vm978, %v962
  %996 = vst.msk [vmem:[#allocation2 + $0x88] sm:$0xff] %vm978, %v963
  %997 = vst.msk [vmem:[#allocation2 + $0x90] sm:$0xff] %vm978, %v964
  %998 = vst.msk [vmem:[#allocation2 + $0x98] sm:$0xff] %vm978, %v965
  %999 = vst.msk [vmem:[#allocation2 + $0xa0] sm:$0xff] %vm978, %v966
  %1000 = vst.msk [vmem:[#allocation2 + $0xa8] sm:$0xff] %vm978, %v967
  %1001 = vst.msk [vmem:[#allocation2 + $0xb0] sm:$0xff] %vm978, %v968
  %1002 = vst.msk [vmem:[#allocation2 + $0xb8] sm:$0xff] %vm978, %v969
  %1003 = vst.msk [vmem:[#allocation2 + $0xc0] sm:$0xff] %vm978, %v970
  %1004 = vst.msk [vmem:[#allocation2 + $0xc8] sm:$0xff] %vm978, %v971
  %1005 = vst.msk [vmem:[#allocation2 + $0xd0] sm:$0xff] %vm978, %v972
  %1006 = vst.msk [vmem:[#allocation2 + $0xd8] sm:$0xff] %vm978, %v973
  %1007 = vst.msk [vmem:[#allocation2 + $0xe0] sm:$0xff] %vm978, %v974
  %1008 = vst.msk [vmem:[#allocation2 + $0xe8] sm:$0xff] %vm978, %v975
  %1009 = vst.msk [vmem:[#allocation2 + $0xf0] sm:$0xff] %vm978, %v976
  %1010 = vst.msk [vmem:[#allocation2 + $0xf8] sm:$0xff] %vm978, %v977
  %v1011 = vld [vmem:[#allocation3] sm:$0xff]
  %v1012 = vld [vmem:[#allocation3 + $0x8] sm:$0xff]
  %v1013 = vld [vmem:[#allocation3 + $0x10] sm:$0xff]
  %v1014 = vld [vmem:[#allocation3 + $0x18] sm:$0xff]
  %v1015 = vld [vmem:[#allocation3 + $0x20] sm:$0xff]
  %v1016 = vld [vmem:[#allocation3 + $0x28] sm:$0xff]
  %v1017 = vld [vmem:[#allocation3 + $0x30] sm:$0xff]
  %v1018 = vld [vmem:[#allocation3 + $0x38] sm:$0xff]
  %v1019 = vld [vmem:[#allocation3 + $0x40] sm:$0xff]
  %v1020 = vld [vmem:[#allocation3 + $0x48] sm:$0xff]
  %v1021 = vld [vmem:[#allocation3 + $0x50] sm:$0xff]
  %v1022 = vld [vmem:[#allocation3 + $0x58] sm:$0xff]
  %v1023 = vld [vmem:[#allocation3 + $0x60] sm:$0xff]
  %v1024 = vld [vmem:[#allocation3 + $0x68] sm:$0xff]
  %v1025 = vld [vmem:[#allocation3 + $0x70] sm:$0xff]
  %v1026 = vld [vmem:[#allocation3 + $0x78] sm:$0xff]
  %v1027 = vld [vmem:[#allocation3 + $0x80] sm:$0xff]
  %v1028 = vld [vmem:[#allocation3 + $0x88] sm:$0xff]
  %v1029 = vld [vmem:[#allocation3 + $0x90] sm:$0xff]
  %v1030 = vld [vmem:[#allocation3 + $0x98] sm:$0xff]
  %v1031 = vld [vmem:[#allocation3 + $0xa0] sm:$0xff]
  %v1032 = vld [vmem:[#allocation3 + $0xa8] sm:$0xff]
  %v1033 = vld [vmem:[#allocation3 + $0xb0] sm:$0xff]
  %v1034 = vld [vmem:[#allocation3 + $0xb8] sm:$0xff]
  %v1035 = vld [vmem:[#allocation3 + $0xc0] sm:$0xff]
  %v1036 = vld [vmem:[#allocation3 + $0xc8] sm:$0xff]
  %v1037 = vld [vmem:[#allocation3 + $0xd0] sm:$0xff]
  %v1038 = vld [vmem:[#allocation3 + $0xd8] sm:$0xff]
  %v1039 = vld [vmem:[#allocation3 + $0xe0] sm:$0xff]
  %v1040 = vld [vmem:[#allocation3 + $0xe8] sm:$0xff]
  %v1041 = vld [vmem:[#allocation3 + $0xf0] sm:$0xff]
  %v1042 = vld [vmem:[#allocation3 + $0xf8] sm:$0xff]
  %v1043 = vsel %vm690, 1e+30, %v489
  %v1044 = vsel %vm691, 1e+30, %v490
  %v1045 = vsel %vm692, 1e+30, %v491
  %v1046 = vsel %vm693, 1e+30, %v492
  %v1047 = vsel %vm694, 1e+30, %v493
  %v1048 = vsel %vm695, 1e+30, %v494
  %v1049 = vsel %vm696, 1e+30, %v495
  %v1050 = vsel %vm697, 1e+30, %v496
  %v1051 = vsel %vm698, 1e+30, %v497
  %v1052 = vsel %vm699, 1e+30, %v498
  %v1053 = vsel %vm700, 1e+30, %v499
  %v1054 = vsel %vm701, 1e+30, %v500
  %v1055 = vsel %vm702, 1e+30, %v501
  %v1056 = vsel %vm703, 1e+30, %v502
  %v1057 = vsel %vm704, 1e+30, %v503
  %v1058 = vsel %vm705, 1e+30, %v504
  %v1059 = vsel %vm706, 1e+30, %v505
  %v1060 = vsel %vm707, 1e+30, %v506
  %v1061 = vsel %vm708, 1e+30, %v507
  %v1062 = vsel %vm709, 1e+30, %v508
  %v1063 = vsel %vm710, 1e+30, %v509
  %v1064 = vsel %vm711, 1e+30, %v510
  %v1065 = vsel %vm712, 1e+30, %v511
  %v1066 = vsel %vm713, 1e+30, %v512
  %v1067 = vsel %vm714, 1e+30, %v513
  %v1068 = vsel %vm715, 1e+30, %v514
  %v1069 = vsel %vm716, 1e+30, %v515
  %v1070 = vsel %vm717, 1e+30, %v516
  %v1071 = vsel %vm718, 1e+30, %v517
  %v1072 = vsel %vm719, 1e+30, %v518
  %v1073 = vsel %vm720, 1e+30, %v519
  %v1074 = vsel %vm721, 1e+30, %v520
  %v1075 = vsel %vm722, 1e+30, %v521
  %v1076 = vsel %vm723, 1e+30, %v522
  %v1077 = vsel %vm724, 1e+30, %v523
  %v1078 = vsel %vm725, 1e+30, %v524
  %v1079 = vsel %vm726, 1e+30, %v525
  %v1080 = vsel %vm727, 1e+30, %v526
  %v1081 = vsel %vm728, 1e+30, %v527
  %v1082 = vsel %vm729, 1e+30, %v528
  %v1083 = vsel %vm730, 1e+30, %v529
  %v1084 = vsel %vm731, 1e+30, %v530
  %v1085 = vsel %vm732, 1e+30, %v531
  %v1086 = vsel %vm733, 1e+30, %v532
  %v1087 = vsel %vm734, 1e+30, %v533
  %v1088 = vsel %vm735, 1e+30, %v534
  %v1089 = vsel %vm736, 1e+30, %v535
  %v1090 = vsel %vm737, 1e+30, %v536
  %v1091 = vsel %vm738, 1e+30, %v537
  %v1092 = vsel %vm739, 1e+30, %v538
  %v1093 = vsel %vm740, 1e+30, %v539
  %v1094 = vsel %vm741, 1e+30, %v540
  %v1095 = vsel %vm742, 1e+30, %v541
  %v1096 = vsel %vm743, 1e+30, %v542
  %v1097 = vsel %vm744, 1e+30, %v543
  %v1098 = vsel %vm745, 1e+30, %v544
  %v1099 = vsel %vm746, 1e+30, %v545
  %v1100 = vsel %vm747, 1e+30, %v546
  %v1101 = vsel %vm748, 1e+30, %v547
  %v1102 = vsel %vm749, 1e+30, %v548
  %v1103 = vsel %vm750, 1e+30, %v549
  %v1104 = vsel %vm751, 1e+30, %v550
  %v1105 = vsel %vm752, 1e+30, %v551
  %v1106 = vsel %vm753, 1e+30, %v552
  %v1107 = vmin.f32 %v1043, %v1044
  %1108 = vmin.xlane.f32.xlu0 %v1107
  %v1109 = vpop.xlane.xlu0 %1108
  %v1110 = vmin.f32 %v1045, %v1046
  %1111 = vmin.xlane.f32.xlu0 %v1110
  %v1112 = vpop.xlane.xlu0 %1111
  %v1113 = vmin.f32 %v1047, %v1048
  %1114 = vmin.xlane.f32.xlu0 %v1113
  %v1115 = vpop.xlane.xlu0 %1114
  %v1116 = vmin.f32 %v1049, %v1050
  %1117 = vmin.xlane.f32.xlu0 %v1116
  %v1118 = vpop.xlane.xlu0 %1117
  %v1119 = vmin.f32 %v1051, %v1052
  %1120 = vmin.xlane.f32.xlu0 %v1119
  %v1121 = vpop.xlane.xlu0 %1120
  %v1122 = vmin.f32 %v1053, %v1054
  %1123 = vmin.xlane.f32.xlu0 %v1122
  %v1124 = vpop.xlane.xlu0 %1123
  %v1125 = vmin.f32 %v1055, %v1056
  %1126 = vmin.xlane.f32.xlu0 %v1125
  %v1127 = vpop.xlane.xlu0 %1126
  %v1128 = vmin.f32 %v1057, %v1058
  %1129 = vmin.xlane.f32.xlu0 %v1128
  %v1130 = vpop.xlane.xlu0 %1129
  %v1131 = vmin.f32 %v1059, %v1060
  %1132 = vmin.xlane.f32.xlu0 %v1131
  %v1133 = vpop.xlane.xlu0 %1132
  %v1134 = vmin.f32 %v1061, %v1062
  %1135 = vmin.xlane.f32.xlu0 %v1134
  %v1136 = vpop.xlane.xlu0 %1135
  %v1137 = vmin.f32 %v1063, %v1064
  %1138 = vmin.xlane.f32.xlu0 %v1137
  %v1139 = vpop.xlane.xlu0 %1138
  %v1140 = vmin.f32 %v1065, %v1066
  %1141 = vmin.xlane.f32.xlu0 %v1140
  %v1142 = vpop.xlane.xlu0 %1141
  %v1143 = vmin.f32 %v1067, %v1068
  %1144 = vmin.xlane.f32.xlu0 %v1143
  %v1145 = vpop.xlane.xlu0 %1144
  %v1146 = vmin.f32 %v1069, %v1070
  %1147 = vmin.xlane.f32.xlu0 %v1146
  %v1148 = vpop.xlane.xlu0 %1147
  %v1149 = vmin.f32 %v1071, %v1072
  %1150 = vmin.xlane.f32.xlu0 %v1149
  %v1151 = vpop.xlane.xlu0 %1150
  %v1152 = vmin.f32 %v1073, %v1074
  %1153 = vmin.xlane.f32.xlu0 %v1152
  %v1154 = vpop.xlane.xlu0 %1153
  %v1155 = vmin.f32 %v1075, %v1076
  %1156 = vmin.xlane.f32.xlu0 %v1155
  %v1157 = vpop.xlane.xlu0 %1156
  %v1158 = vmin.f32 %v1077, %v1078
  %1159 = vmin.xlane.f32.xlu0 %v1158
  %v1160 = vpop.xlane.xlu0 %1159
  %v1161 = vmin.f32 %v1079, %v1080
  %1162 = vmin.xlane.f32.xlu0 %v1161
  %v1163 = vpop.xlane.xlu0 %1162
  %v1164 = vmin.f32 %v1081, %v1082
  %1165 = vmin.xlane.f32.xlu0 %v1164
  %v1166 = vpop.xlane.xlu0 %1165
  %v1167 = vmin.f32 %v1083, %v1084
  %1168 = vmin.xlane.f32.xlu0 %v1167
  %v1169 = vpop.xlane.xlu0 %1168
  %v1170 = vmin.f32 %v1085, %v1086
  %1171 = vmin.xlane.f32.xlu0 %v1170
  %v1172 = vpop.xlane.xlu0 %1171
  %v1173 = vmin.f32 %v1087, %v1088
  %1174 = vmin.xlane.f32.xlu0 %v1173
  %v1175 = vpop.xlane.xlu0 %1174
  %v1176 = vmin.f32 %v1089, %v1090
  %1177 = vmin.xlane.f32.xlu0 %v1176
  %v1178 = vpop.xlane.xlu0 %1177
  %v1179 = vmin.f32 %v1091, %v1092
  %1180 = vmin.xlane.f32.xlu0 %v1179
  %v1181 = vpop.xlane.xlu0 %1180
  %v1182 = vmin.f32 %v1093, %v1094
  %1183 = vmin.xlane.f32.xlu0 %v1182
  %v1184 = vpop.xlane.xlu0 %1183
  %v1185 = vmin.f32 %v1095, %v1096
  %1186 = vmin.xlane.f32.xlu0 %v1185
  %v1187 = vpop.xlane.xlu0 %1186
  %v1188 = vmin.f32 %v1097, %v1098
  %1189 = vmin.xlane.f32.xlu0 %v1188
  %v1190 = vpop.xlane.xlu0 %1189
  %v1191 = vmin.f32 %v1099, %v1100
  %1192 = vmin.xlane.f32.xlu0 %v1191
  %v1193 = vpop.xlane.xlu0 %1192
  %v1194 = vmin.f32 %v1101, %v1102
  %1195 = vmin.xlane.f32.xlu0 %v1194
  %v1196 = vpop.xlane.xlu0 %1195
  %v1197 = vmin.f32 %v1103, %v1104
  %1198 = vmin.xlane.f32.xlu0 %v1197
  %v1199 = vpop.xlane.xlu0 %1198
  %v1200 = vmin.f32 %v1105, %v1106
  %1201 = vmin.xlane.f32.xlu0 %v1200
  %v1202 = vpop.xlane.xlu0 %1201
  %v1203 = vmin.f32 %v1011, %v1109
  %v1204 = vmin.f32 %v1012, %v1112
  %v1205 = vmin.f32 %v1013, %v1115
  %v1206 = vmin.f32 %v1014, %v1118
  %v1207 = vmin.f32 %v1015, %v1121
  %v1208 = vmin.f32 %v1016, %v1124
  %v1209 = vmin.f32 %v1017, %v1127
  %v1210 = vmin.f32 %v1018, %v1130
  %v1211 = vmin.f32 %v1019, %v1133
  %v1212 = vmin.f32 %v1020, %v1136
  %v1213 = vmin.f32 %v1021, %v1139
  %v1214 = vmin.f32 %v1022, %v1142
  %v1215 = vmin.f32 %v1023, %v1145
  %v1216 = vmin.f32 %v1024, %v1148
  %v1217 = vmin.f32 %v1025, %v1151
  %v1218 = vmin.f32 %v1026, %v1154
  %v1219 = vmin.f32 %v1027, %v1157
  %v1220 = vmin.f32 %v1028, %v1160
  %v1221 = vmin.f32 %v1029, %v1163
  %v1222 = vmin.f32 %v1030, %v1166
  %v1223 = vmin.f32 %v1031, %v1169
  %v1224 = vmin.f32 %v1032, %v1172
  %v1225 = vmin.f32 %v1033, %v1175
  %v1226 = vmin.f32 %v1034, %v1178
  %v1227 = vmin.f32 %v1035, %v1181
  %v1228 = vmin.f32 %v1036, %v1184
  %v1229 = vmin.f32 %v1037, %v1187
  %v1230 = vmin.f32 %v1038, %v1190
  %v1231 = vmin.f32 %v1039, %v1193
  %v1232 = vmin.f32 %v1040, %v1196
  %v1233 = vmin.f32 %v1041, %v1199
  %v1234 = vmin.f32 %v1042, %v1202
  %1235 = vst.msk [vmem:[#allocation3] sm:$0xff] %vm978, %v1203
  %1236 = vst.msk [vmem:[#allocation3 + $0x8] sm:$0xff] %vm978, %v1204
  %1237 = vst.msk [vmem:[#allocation3 + $0x10] sm:$0xff] %vm978, %v1205
  %1238 = vst.msk [vmem:[#allocation3 + $0x18] sm:$0xff] %vm978, %v1206
  %1239 = vst.msk [vmem:[#allocation3 + $0x20] sm:$0xff] %vm978, %v1207
  %1240 = vst.msk [vmem:[#allocation3 + $0x28] sm:$0xff] %vm978, %v1208
  %1241 = vst.msk [vmem:[#allocation3 + $0x30] sm:$0xff] %vm978, %v1209
  %1242 = vst.msk [vmem:[#allocation3 + $0x38] sm:$0xff] %vm978, %v1210
  %1243 = vst.msk [vmem:[#allocation3 + $0x40] sm:$0xff] %vm978, %v1211
  %1244 = vst.msk [vmem:[#allocation3 + $0x48] sm:$0xff] %vm978, %v1212
  %1245 = vst.msk [vmem:[#allocation3 + $0x50] sm:$0xff] %vm978, %v1213
  %1246 = vst.msk [vmem:[#allocation3 + $0x58] sm:$0xff] %vm978, %v1214
  %1247 = vst.msk [vmem:[#allocation3 + $0x60] sm:$0xff] %vm978, %v1215
  %1248 = vst.msk [vmem:[#allocation3 + $0x68] sm:$0xff] %vm978, %v1216
  %1249 = vst.msk [vmem:[#allocation3 + $0x70] sm:$0xff] %vm978, %v1217
  %1250 = vst.msk [vmem:[#allocation3 + $0x78] sm:$0xff] %vm978, %v1218
  %1251 = vst.msk [vmem:[#allocation3 + $0x80] sm:$0xff] %vm978, %v1219
  %1252 = vst.msk [vmem:[#allocation3 + $0x88] sm:$0xff] %vm978, %v1220
  %1253 = vst.msk [vmem:[#allocation3 + $0x90] sm:$0xff] %vm978, %v1221
  %1254 = vst.msk [vmem:[#allocation3 + $0x98] sm:$0xff] %vm978, %v1222
  %1255 = vst.msk [vmem:[#allocation3 + $0xa0] sm:$0xff] %vm978, %v1223
  %1256 = vst.msk [vmem:[#allocation3 + $0xa8] sm:$0xff] %vm978, %v1224
  %1257 = vst.msk [vmem:[#allocation3 + $0xb0] sm:$0xff] %vm978, %v1225
  %1258 = vst.msk [vmem:[#allocation3 + $0xb8] sm:$0xff] %vm978, %v1226
  %1259 = vst.msk [vmem:[#allocation3 + $0xc0] sm:$0xff] %vm978, %v1227
  %1260 = vst.msk [vmem:[#allocation3 + $0xc8] sm:$0xff] %vm978, %v1228
  %1261 = vst.msk [vmem:[#allocation3 + $0xd0] sm:$0xff] %vm978, %v1229
  %1262 = vst.msk [vmem:[#allocation3 + $0xd8] sm:$0xff] %vm978, %v1230
  %1263 = vst.msk [vmem:[#allocation3 + $0xe0] sm:$0xff] %vm978, %v1231
  %1264 = vst.msk [vmem:[#allocation3 + $0xe8] sm:$0xff] %vm978, %v1232
  %1265 = vst.msk [vmem:[#allocation3 + $0xf0] sm:$0xff] %vm978, %v1233
  %1266 = vst.msk [vmem:[#allocation3 + $0xf8] sm:$0xff] %vm978, %v1234
  // Predicated region
  $region30: #{tpu_custom_call.1} parent=0 // pred_check
    %p1267 = pneg %p23
  $region31: #{tpu_custom_call.1} parent=0 // pred_check_branch
    %1269 = sbr.rel (%p1267) target = $region33
  $region32: #{tpu_custom_call.1} parent=0 // pred_region
    %v1270 = vld [vmem:[%s2] sm:$0xff]
    %v1271 = vld [vmem:[%s2 + $0x8] sm:$0xff]
    %v1272 = vld [vmem:[%s2 + $0x10] sm:$0xff]
    %v1273 = vld [vmem:[%s2 + $0x18] sm:$0xff]
    %v1274 = vld [vmem:[%s2 + $0x20] sm:$0xff]
    %v1275 = vld [vmem:[%s2 + $0x28] sm:$0xff]
    %v1276 = vld [vmem:[%s2 + $0x30] sm:$0xff]
    %v1277 = vld [vmem:[%s2 + $0x38] sm:$0xff]
    %v1278 = vld [vmem:[%s2 + $0x40] sm:$0xff]
    %v1279 = vld [vmem:[%s2 + $0x48] sm:$0xff]
    %v1280 = vld [vmem:[%s2 + $0x50] sm:$0xff]
    %v1281 = vld [vmem:[%s2 + $0x58] sm:$0xff]
    %v1282 = vld [vmem:[%s2 + $0x60] sm:$0xff]
    %v1283 = vld [vmem:[%s2 + $0x68] sm:$0xff]
    %v1284 = vld [vmem:[%s2 + $0x70] sm:$0xff]
    %v1285 = vld [vmem:[%s2 + $0x78] sm:$0xff]
    %v1286 = vld [vmem:[%s2 + $0x80] sm:$0xff]
    %v1287 = vld [vmem:[%s2 + $0x88] sm:$0xff]
    %v1288 = vld [vmem:[%s2 + $0x90] sm:$0xff]
    %v1289 = vld [vmem:[%s2 + $0x98] sm:$0xff]
    %v1290 = vld [vmem:[%s2 + $0xa0] sm:$0xff]
    %v1291 = vld [vmem:[%s2 + $0xa8] sm:$0xff]
    %v1292 = vld [vmem:[%s2 + $0xb0] sm:$0xff]
    %v1293 = vld [vmem:[%s2 + $0xb8] sm:$0xff]
    %v1294 = vld [vmem:[%s2 + $0xc0] sm:$0xff]
    %v1295 = vld [vmem:[%s2 + $0xc8] sm:$0xff]
    %v1296 = vld [vmem:[%s2 + $0xd0] sm:$0xff]
    %v1297 = vld [vmem:[%s2 + $0xd8] sm:$0xff]
    %v1298 = vld [vmem:[%s2 + $0xe0] sm:$0xff]
    %v1299 = vld [vmem:[%s2 + $0xe8] sm:$0xff]
    %v1300 = vld [vmem:[%s2 + $0xf0] sm:$0xff]
    %v1301 = vld [vmem:[%s2 + $0xf8] sm:$0xff]
    %v1302 = vld [vmem:[#allocation2] sm:$0xff]
    %v1303 = vld [vmem:[#allocation2 + $0x8] sm:$0xff]
    %v1304 = vld [vmem:[#allocation2 + $0x10] sm:$0xff]
    %v1305 = vld [vmem:[#allocation2 + $0x18] sm:$0xff]
    %v1306 = vld [vmem:[#allocation2 + $0x20] sm:$0xff]
    %v1307 = vld [vmem:[#allocation2 + $0x28] sm:$0xff]
    %v1308 = vld [vmem:[#allocation2 + $0x30] sm:$0xff]
    %v1309 = vld [vmem:[#allocation2 + $0x38] sm:$0xff]
    %v1310 = vld [vmem:[#allocation2 + $0x40] sm:$0xff]
    %v1311 = vld [vmem:[#allocation2 + $0x48] sm:$0xff]
    %v1312 = vld [vmem:[#allocation2 + $0x50] sm:$0xff]
    %v1313 = vld [vmem:[#allocation2 + $0x58] sm:$0xff]
    %v1314 = vld [vmem:[#allocation2 + $0x60] sm:$0xff]
    %v1315 = vld [vmem:[#allocation2 + $0x68] sm:$0xff]
    %v1316 = vld [vmem:[#allocation2 + $0x70] sm:$0xff]
    %v1317 = vld [vmem:[#allocation2 + $0x78] sm:$0xff]
    %v1318 = vld [vmem:[#allocation2 + $0x80] sm:$0xff]
    %v1319 = vld [vmem:[#allocation2 + $0x88] sm:$0xff]
    %v1320 = vld [vmem:[#allocation2 + $0x90] sm:$0xff]
    %v1321 = vld [vmem:[#allocation2 + $0x98] sm:$0xff]
    %v1322 = vld [vmem:[#allocation2 + $0xa0] sm:$0xff]
    %v1323 = vld [vmem:[#allocation2 + $0xa8] sm:$0xff]
    %v1324 = vld [vmem:[#allocation2 + $0xb0] sm:$0xff]
    %v1325 = vld [vmem:[#allocation2 + $0xb8] sm:$0xff]
    %v1326 = vld [vmem:[#allocation2 + $0xc0] sm:$0xff]
    %v1327 = vld [vmem:[#allocation2 + $0xc8] sm:$0xff]
    %v1328 = vld [vmem:[#allocation2 + $0xd0] sm:$0xff]
    %v1329 = vld [vmem:[#allocation2 + $0xd8] sm:$0xff]
    %v1330 = vld [vmem:[#allocation2 + $0xe0] sm:$0xff]
    %v1331 = vld [vmem:[#allocation2 + $0xe8] sm:$0xff]
    %v1332 = vld [vmem:[#allocation2 + $0xf0] sm:$0xff]
    %v1333 = vld [vmem:[#allocation2 + $0xf8] sm:$0xff]
    %v1334 = vadd.f32 %v1302, %v1270
    %v1335 = vadd.f32 %v1303, %v1271
    %v1336 = vadd.f32 %v1304, %v1272
    %v1337 = vadd.f32 %v1305, %v1273
    %v1338 = vadd.f32 %v1306, %v1274
    %v1339 = vadd.f32 %v1307, %v1275
    %v1340 = vadd.f32 %v1308, %v1276
    %v1341 = vadd.f32 %v1309, %v1277
    %v1342 = vadd.f32 %v1310, %v1278
    %v1343 = vadd.f32 %v1311, %v1279
    %v1344 = vadd.f32 %v1312, %v1280
    %v1345 = vadd.f32 %v1313, %v1281
    %v1346 = vadd.f32 %v1314, %v1282
    %v1347 = vadd.f32 %v1315, %v1283
    %v1348 = vadd.f32 %v1316, %v1284
    %v1349 = vadd.f32 %v1317, %v1285
    %v1350 = vadd.f32 %v1318, %v1286
    %v1351 = vadd.f32 %v1319, %v1287
    %v1352 = vadd.f32 %v1320, %v1288
    %v1353 = vadd.f32 %v1321, %v1289
    %v1354 = vadd.f32 %v1322, %v1290
    %v1355 = vadd.f32 %v1323, %v1291
    %v1356 = vadd.f32 %v1324, %v1292
    %v1357 = vadd.f32 %v1325, %v1293
    %v1358 = vadd.f32 %v1326, %v1294
    %v1359 = vadd.f32 %v1327, %v1295
    %v1360 = vadd.f32 %v1328, %v1296
    %v1361 = vadd.f32 %v1329, %v1297
    %v1362 = vadd.f32 %v1330, %v1298
    %v1363 = vadd.f32 %v1331, %v1299
    %v1364 = vadd.f32 %v1332, %v1300
    %v1365 = vadd.f32 %v1333, %v1301
    %v1366 = vmax.f32 %v1334, 1e-12
    %v1367 = vmax.f32 %v1335, 1e-12
    %v1368 = vmax.f32 %v1336, 1e-12
    %v1369 = vmax.f32 %v1337, 1e-12
    %v1370 = vmax.f32 %v1338, 1e-12
    %v1371 = vmax.f32 %v1339, 1e-12
    %v1372 = vmax.f32 %v1340, 1e-12
    %v1373 = vmax.f32 %v1341, 1e-12
    %v1374 = vmax.f32 %v1342, 1e-12
    %v1375 = vmax.f32 %v1343, 1e-12
    %v1376 = vmax.f32 %v1344, 1e-12
    %v1377 = vmax.f32 %v1345, 1e-12
    %v1378 = vmax.f32 %v1346, 1e-12
    %v1379 = vmax.f32 %v1347, 1e-12
    %v1380 = vmax.f32 %v1348, 1e-12
    %v1381 = vmax.f32 %v1349, 1e-12
    %v1382 = vmax.f32 %v1350, 1e-12
    %v1383 = vmax.f32 %v1351, 1e-12
    %v1384 = vmax.f32 %v1352, 1e-12
    %v1385 = vmax.f32 %v1353, 1e-12
    %v1386 = vmax.f32 %v1354, 1e-12
    %v1387 = vmax.f32 %v1355, 1e-12
    %v1388 = vmax.f32 %v1356, 1e-12
    %v1389 = vmax.f32 %v1357, 1e-12
    %v1390 = vmax.f32 %v1358, 1e-12
    %v1391 = vmax.f32 %v1359, 1e-12
    %v1392 = vmax.f32 %v1360, 1e-12
    %v1393 = vmax.f32 %v1361, 1e-12
    %v1394 = vmax.f32 %v1362, 1e-12
    %v1395 = vmax.f32 %v1363, 1e-12
    %v1396 = vmax.f32 %v1364, 1e-12
    %v1397 = vmax.f32 %v1365, 1e-12
    %v1398 = vrsqrt.pop %v1366
    %v1399 = vmul.f32 %v1366, %v1398
    %vm1400 = vcmp.eq.f32.partialorder %v1366, inf
    %v1401 = vsel %vm1400, %v1366, %v1399
    %vm1402 = vcmp.eq.f32.partialorder %v1366, 0.0
    %v1403 = vand.u32 %v1366, 2147483648
    %v1404 = vsel %vm1402, %v1403, %v1401
    %v1405 = vrsqrt.pop %v1367
    %v1406 = vmul.f32 %v1367, %v1405
    %vm1407 = vcmp.eq.f32.partialorder %v1367, inf
    %v1408 = vsel %vm1407, %v1367, %v1406
    %vm1409 = vcmp.eq.f32.partialorder %v1367, 0.0
    %v1410 = vand.u32 %v1367, 2147483648
    %v1411 = vsel %vm1409, %v1410, %v1408
    %v1412 = vrsqrt.pop %v1368
    %v1413 = vmul.f32 %v1368, %v1412
    %vm1414 = vcmp.eq.f32.partialorder %v1368, inf
    %v1415 = vsel %vm1414, %v1368, %v1413
    %vm1416 = vcmp.eq.f32.partialorder %v1368, 0.0
    %v1417 = vand.u32 %v1368, 2147483648
    %v1418 = vsel %vm1416, %v1417, %v1415
    %v1419 = vrsqrt.pop %v1369
    %v1420 = vmul.f32 %v1369, %v1419
    %vm1421 = vcmp.eq.f32.partialorder %v1369, inf
    %v1422 = vsel %vm1421, %v1369, %v1420
    %vm1423 = vcmp.eq.f32.partialorder %v1369, 0.0
    %v1424 = vand.u32 %v1369, 2147483648
    %v1425 = vsel %vm1423, %v1424, %v1422
    %v1426 = vrsqrt.pop %v1370
    %v1427 = vmul.f32 %v1370, %v1426
    %vm1428 = vcmp.eq.f32.partialorder %v1370, inf
    %v1429 = vsel %vm1428, %v1370, %v1427
    %vm1430 = vcmp.eq.f32.partialorder %v1370, 0.0
    %v1431 = vand.u32 %v1370, 2147483648
    %v1432 = vsel %vm1430, %v1431, %v1429
    %v1433 = vrsqrt.pop %v1371
    %v1434 = vmul.f32 %v1371, %v1433
    %vm1435 = vcmp.eq.f32.partialorder %v1371, inf
    %v1436 = vsel %vm1435, %v1371, %v1434
    %vm1437 = vcmp.eq.f32.partialorder %v1371, 0.0
    %v1438 = vand.u32 %v1371, 2147483648
    %v1439 = vsel %vm1437, %v1438, %v1436
    %v1440 = vrsqrt.pop %v1372
    %v1441 = vmul.f32 %v1372, %v1440
    %vm1442 = vcmp.eq.f32.partialorder %v1372, inf
    %v1443 = vsel %vm1442, %v1372, %v1441
    %vm1444 = vcmp.eq.f32.partialorder %v1372, 0.0
    %v1445 = vand.u32 %v1372, 2147483648
    %v1446 = vsel %vm1444, %v1445, %v1443
    %v1447 = vrsqrt.pop %v1373
    %v1448 = vmul.f32 %v1373, %v1447
    %vm1449 = vcmp.eq.f32.partialorder %v1373, inf
    %v1450 = vsel %vm1449, %v1373, %v1448
    %vm1451 = vcmp.eq.f32.partialorder %v1373, 0.0
    %v1452 = vand.u32 %v1373, 2147483648
    %v1453 = vsel %vm1451, %v1452, %v1450
    %v1454 = vrsqrt.pop %v1374
    %v1455 = vmul.f32 %v1374, %v1454
    %vm1456 = vcmp.eq.f32.partialorder %v1374, inf
    %v1457 = vsel %vm1456, %v1374, %v1455
    %vm1458 = vcmp.eq.f32.partialorder %v1374, 0.0
    %v1459 = vand.u32 %v1374, 2147483648
    %v1460 = vsel %vm1458, %v1459, %v1457
    %v1461 = vrsqrt.pop %v1375
    %v1462 = vmul.f32 %v1375, %v1461
    %vm1463 = vcmp.eq.f32.partialorder %v1375, inf
    %v1464 = vsel %vm1463, %v1375, %v1462
    %vm1465 = vcmp.eq.f32.partialorder %v1375, 0.0
    %v1466 = vand.u32 %v1375, 2147483648
    %v1467 = vsel %vm1465, %v1466, %v1464
    %v1468 = vrsqrt.pop %v1376
    %v1469 = vmul.f32 %v1376, %v1468
    %vm1470 = vcmp.eq.f32.partialorder %v1376, inf
    %v1471 = vsel %vm1470, %v1376, %v1469
    %vm1472 = vcmp.eq.f32.partialorder %v1376, 0.0
    %v1473 = vand.u32 %v1376, 2147483648
    %v1474 = vsel %vm1472, %v1473, %v1471
    %v1475 = vrsqrt.pop %v1377
    %v1476 = vmul.f32 %v1377, %v1475
    %vm1477 = vcmp.eq.f32.partialorder %v1377, inf
    %v1478 = vsel %vm1477, %v1377, %v1476
    %vm1479 = vcmp.eq.f32.partialorder %v1377, 0.0
    %v1480 = vand.u32 %v1377, 2147483648
    %v1481 = vsel %vm1479, %v1480, %v1478
    %v1482 = vrsqrt.pop %v1378
    %v1483 = vmul.f32 %v1378, %v1482
    %vm1484 = vcmp.eq.f32.partialorder %v1378, inf
    %v1485 = vsel %vm1484, %v1378, %v1483
    %vm1486 = vcmp.eq.f32.partialorder %v1378, 0.0
    %v1487 = vand.u32 %v1378, 2147483648
    %v1488 = vsel %vm1486, %v1487, %v1485
    %v1489 = vrsqrt.pop %v1379
    %v1490 = vmul.f32 %v1379, %v1489
    %vm1491 = vcmp.eq.f32.partialorder %v1379, inf
    %v1492 = vsel %vm1491, %v1379, %v1490
    %vm1493 = vcmp.eq.f32.partialorder %v1379, 0.0
    %v1494 = vand.u32 %v1379, 2147483648
    %v1495 = vsel %vm1493, %v1494, %v1492
    %v1496 = vrsqrt.pop %v1380
    %v1497 = vmul.f32 %v1380, %v1496
    %vm1498 = vcmp.eq.f32.partialorder %v1380, inf
    %v1499 = vsel %vm1498, %v1380, %v1497
    %vm1500 = vcmp.eq.f32.partialorder %v1380, 0.0
    %v1501 = vand.u32 %v1380, 2147483648
    %v1502 = vsel %vm1500, %v1501, %v1499
    %v1503 = vrsqrt.pop %v1381
    %v1504 = vmul.f32 %v1381, %v1503
    %vm1505 = vcmp.eq.f32.partialorder %v1381, inf
    %v1506 = vsel %vm1505, %v1381, %v1504
    %vm1507 = vcmp.eq.f32.partialorder %v1381, 0.0
    %v1508 = vand.u32 %v1381, 2147483648
    %v1509 = vsel %vm1507, %v1508, %v1506
    %v1510 = vrsqrt.pop %v1382
    %v1511 = vmul.f32 %v1382, %v1510
    %vm1512 = vcmp.eq.f32.partialorder %v1382, inf
    %v1513 = vsel %vm1512, %v1382, %v1511
    %vm1514 = vcmp.eq.f32.partialorder %v1382, 0.0
    %v1515 = vand.u32 %v1382, 2147483648
    %v1516 = vsel %vm1514, %v1515, %v1513
    %v1517 = vrsqrt.pop %v1383
    %v1518 = vmul.f32 %v1383, %v1517
    %vm1519 = vcmp.eq.f32.partialorder %v1383, inf
    %v1520 = vsel %vm1519, %v1383, %v1518
    %vm1521 = vcmp.eq.f32.partialorder %v1383, 0.0
    %v1522 = vand.u32 %v1383, 2147483648
    %v1523 = vsel %vm1521, %v1522, %v1520
    %v1524 = vrsqrt.pop %v1384
    %v1525 = vmul.f32 %v1384, %v1524
    %vm1526 = vcmp.eq.f32.partialorder %v1384, inf
    %v1527 = vsel %vm1526, %v1384, %v1525
    %vm1528 = vcmp.eq.f32.partialorder %v1384, 0.0
    %v1529 = vand.u32 %v1384, 2147483648
    %v1530 = vsel %vm1528, %v1529, %v1527
    %v1531 = vrsqrt.pop %v1385
    %v1532 = vmul.f32 %v1385, %v1531
    %vm1533 = vcmp.eq.f32.partialorder %v1385, inf
    %v1534 = vsel %vm1533, %v1385, %v1532
    %vm1535 = vcmp.eq.f32.partialorder %v1385, 0.0
    %v1536 = vand.u32 %v1385, 2147483648
    %v1537 = vsel %vm1535, %v1536, %v1534
    %v1538 = vrsqrt.pop %v1386
    %v1539 = vmul.f32 %v1386, %v1538
    %vm1540 = vcmp.eq.f32.partialorder %v1386, inf
    %v1541 = vsel %vm1540, %v1386, %v1539
    %vm1542 = vcmp.eq.f32.partialorder %v1386, 0.0
    %v1543 = vand.u32 %v1386, 2147483648
    %v1544 = vsel %vm1542, %v1543, %v1541
    %v1545 = vrsqrt.pop %v1387
    %v1546 = vmul.f32 %v1387, %v1545
    %vm1547 = vcmp.eq.f32.partialorder %v1387, inf
    %v1548 = vsel %vm1547, %v1387, %v1546
    %vm1549 = vcmp.eq.f32.partialorder %v1387, 0.0
    %v1550 = vand.u32 %v1387, 2147483648
    %v1551 = vsel %vm1549, %v1550, %v1548
    %v1552 = vrsqrt.pop %v1388
    %v1553 = vmul.f32 %v1388, %v1552
    %vm1554 = vcmp.eq.f32.partialorder %v1388, inf
    %v1555 = vsel %vm1554, %v1388, %v1553
    %vm1556 = vcmp.eq.f32.partialorder %v1388, 0.0
    %v1557 = vand.u32 %v1388, 2147483648
    %v1558 = vsel %vm1556, %v1557, %v1555
    %v1559 = vrsqrt.pop %v1389
    %v1560 = vmul.f32 %v1389, %v1559
    %vm1561 = vcmp.eq.f32.partialorder %v1389, inf
    %v1562 = vsel %vm1561, %v1389, %v1560
    %vm1563 = vcmp.eq.f32.partialorder %v1389, 0.0
    %v1564 = vand.u32 %v1389, 2147483648
    %v1565 = vsel %vm1563, %v1564, %v1562
    %v1566 = vrsqrt.pop %v1390
    %v1567 = vmul.f32 %v1390, %v1566
    %vm1568 = vcmp.eq.f32.partialorder %v1390, inf
    %v1569 = vsel %vm1568, %v1390, %v1567
    %vm1570 = vcmp.eq.f32.partialorder %v1390, 0.0
    %v1571 = vand.u32 %v1390, 2147483648
    %v1572 = vsel %vm1570, %v1571, %v1569
    %v1573 = vrsqrt.pop %v1391
    %v1574 = vmul.f32 %v1391, %v1573
    %vm1575 = vcmp.eq.f32.partialorder %v1391, inf
    %v1576 = vsel %vm1575, %v1391, %v1574
    %vm1577 = vcmp.eq.f32.partialorder %v1391, 0.0
    %v1578 = vand.u32 %v1391, 2147483648
    %v1579 = vsel %vm1577, %v1578, %v1576
    %v1580 = vrsqrt.pop %v1392
    %v1581 = vmul.f32 %v1392, %v1580
    %vm1582 = vcmp.eq.f32.partialorder %v1392, inf
    %v1583 = vsel %vm1582, %v1392, %v1581
    %vm1584 = vcmp.eq.f32.partialorder %v1392, 0.0
    %v1585 = vand.u32 %v1392, 2147483648
    %v1586 = vsel %vm1584, %v1585, %v1583
    %v1587 = vrsqrt.pop %v1393
    %v1588 = vmul.f32 %v1393, %v1587
    %vm1589 = vcmp.eq.f32.partialorder %v1393, inf
    %v1590 = vsel %vm1589, %v1393, %v1588
    %vm1591 = vcmp.eq.f32.partialorder %v1393, 0.0
    %v1592 = vand.u32 %v1393, 2147483648
    %v1593 = vsel %vm1591, %v1592, %v1590
    %v1594 = vrsqrt.pop %v1394
    %v1595 = vmul.f32 %v1394, %v1594
    %vm1596 = vcmp.eq.f32.partialorder %v1394, inf
    %v1597 = vsel %vm1596, %v1394, %v1595
    %vm1598 = vcmp.eq.f32.partialorder %v1394, 0.0
    %v1599 = vand.u32 %v1394, 2147483648
    %v1600 = vsel %vm1598, %v1599, %v1597
    %v1601 = vrsqrt.pop %v1395
    %v1602 = vmul.f32 %v1395, %v1601
    %vm1603 = vcmp.eq.f32.partialorder %v1395, inf
    %v1604 = vsel %vm1603, %v1395, %v1602
    %vm1605 = vcmp.eq.f32.partialorder %v1395, 0.0
    %v1606 = vand.u32 %v1395, 2147483648
    %v1607 = vsel %vm1605, %v1606, %v1604
    %v1608 = vrsqrt.pop %v1396
    %v1609 = vmul.f32 %v1396, %v1608
    %vm1610 = vcmp.eq.f32.partialorder %v1396, inf
    %v1611 = vsel %vm1610, %v1396, %v1609
    %vm1612 = vcmp.eq.f32.partialorder %v1396, 0.0
    %v1613 = vand.u32 %v1396, 2147483648
    %v1614 = vsel %vm1612, %v1613, %v1611
    %v1615 = vrsqrt.pop %v1397
    %v1616 = vmul.f32 %v1397, %v1615
    %vm1617 = vcmp.eq.f32.partialorder %v1397, inf
    %v1618 = vsel %vm1617, %v1397, %v1616
    %vm1619 = vcmp.eq.f32.partialorder %v1397, 0.0
    %v1620 = vand.u32 %v1397, 2147483648
    %v1621 = vsel %vm1619, %v1620, %v1618
    %v1622 = vld [vmem:[#allocation3] sm:$0xff]
    %v1623 = vld [vmem:[#allocation3 + $0x8] sm:$0xff]
    %v1624 = vld [vmem:[#allocation3 + $0x10] sm:$0xff]
    %v1625 = vld [vmem:[#allocation3 + $0x18] sm:$0xff]
    %v1626 = vld [vmem:[#allocation3 + $0x20] sm:$0xff]
    %v1627 = vld [vmem:[#allocation3 + $0x28] sm:$0xff]
    %v1628 = vld [vmem:[#allocation3 + $0x30] sm:$0xff]
    %v1629 = vld [vmem:[#allocation3 + $0x38] sm:$0xff]
    %v1630 = vld [vmem:[#allocation3 + $0x40] sm:$0xff]
    %v1631 = vld [vmem:[#allocation3 + $0x48] sm:$0xff]
    %v1632 = vld [vmem:[#allocation3 + $0x50] sm:$0xff]
    %v1633 = vld [vmem:[#allocation3 + $0x58] sm:$0xff]
    %v1634 = vld [vmem:[#allocation3 + $0x60] sm:$0xff]
    %v1635 = vld [vmem:[#allocation3 + $0x68] sm:$0xff]
    %v1636 = vld [vmem:[#allocation3 + $0x70] sm:$0xff]
    %v1637 = vld [vmem:[#allocation3 + $0x78] sm:$0xff]
    %v1638 = vld [vmem:[#allocation3 + $0x80] sm:$0xff]
    %v1639 = vld [vmem:[#allocation3 + $0x88] sm:$0xff]
    %v1640 = vld [vmem:[#allocation3 + $0x90] sm:$0xff]
    %v1641 = vld [vmem:[#allocation3 + $0x98] sm:$0xff]
    %v1642 = vld [vmem:[#allocation3 + $0xa0] sm:$0xff]
    %v1643 = vld [vmem:[#allocation3 + $0xa8] sm:$0xff]
    %v1644 = vld [vmem:[#allocation3 + $0xb0] sm:$0xff]
    %v1645 = vld [vmem:[#allocation3 + $0xb8] sm:$0xff]
    %v1646 = vld [vmem:[#allocation3 + $0xc0] sm:$0xff]
    %v1647 = vld [vmem:[#allocation3 + $0xc8] sm:$0xff]
    %v1648 = vld [vmem:[#allocation3 + $0xd0] sm:$0xff]
    %v1649 = vld [vmem:[#allocation3 + $0xd8] sm:$0xff]
    %v1650 = vld [vmem:[#allocation3 + $0xe0] sm:$0xff]
    %v1651 = vld [vmem:[#allocation3 + $0xe8] sm:$0xff]
    %v1652 = vld [vmem:[#allocation3 + $0xf0] sm:$0xff]
    %v1653 = vld [vmem:[#allocation3 + $0xf8] sm:$0xff]
    %v1654 = vadd.f32 %v1622, %v1270
    %v1655 = vadd.f32 %v1623, %v1271
    %v1656 = vadd.f32 %v1624, %v1272
    %v1657 = vadd.f32 %v1625, %v1273
    %v1658 = vadd.f32 %v1626, %v1274
    %v1659 = vadd.f32 %v1627, %v1275
    %v1660 = vadd.f32 %v1628, %v1276
    %v1661 = vadd.f32 %v1629, %v1277
    %v1662 = vadd.f32 %v1630, %v1278
    %v1663 = vadd.f32 %v1631, %v1279
    %v1664 = vadd.f32 %v1632, %v1280
    %v1665 = vadd.f32 %v1633, %v1281
    %v1666 = vadd.f32 %v1634, %v1282
    %v1667 = vadd.f32 %v1635, %v1283
    %v1668 = vadd.f32 %v1636, %v1284
    %v1669 = vadd.f32 %v1637, %v1285
    %v1670 = vadd.f32 %v1638, %v1286
    %v1671 = vadd.f32 %v1639, %v1287
    %v1672 = vadd.f32 %v1640, %v1288
    %v1673 = vadd.f32 %v1641, %v1289
    %v1674 = vadd.f32 %v1642, %v1290
    %v1675 = vadd.f32 %v1643, %v1291
    %v1676 = vadd.f32 %v1644, %v1292
    %v1677 = vadd.f32 %v1645, %v1293
    %v1678 = vadd.f32 %v1646, %v1294
    %v1679 = vadd.f32 %v1647, %v1295
    %v1680 = vadd.f32 %v1648, %v1296
    %v1681 = vadd.f32 %v1649, %v1297
    %v1682 = vadd.f32 %v1650, %v1298
    %v1683 = vadd.f32 %v1651, %v1299
    %v1684 = vadd.f32 %v1652, %v1300
    %v1685 = vadd.f32 %v1653, %v1301
    %v1686 = vmax.f32 %v1654, 1e-12
    %v1687 = vmax.f32 %v1655, 1e-12
    %v1688 = vmax.f32 %v1656, 1e-12
    %v1689 = vmax.f32 %v1657, 1e-12
    %v1690 = vmax.f32 %v1658, 1e-12
    %v1691 = vmax.f32 %v1659, 1e-12
    %v1692 = vmax.f32 %v1660, 1e-12
    %v1693 = vmax.f32 %v1661, 1e-12
    %v1694 = vmax.f32 %v1662, 1e-12
    %v1695 = vmax.f32 %v1663, 1e-12
    %v1696 = vmax.f32 %v1664, 1e-12
    %v1697 = vmax.f32 %v1665, 1e-12
    %v1698 = vmax.f32 %v1666, 1e-12
    %v1699 = vmax.f32 %v1667, 1e-12
    %v1700 = vmax.f32 %v1668, 1e-12
    %v1701 = vmax.f32 %v1669, 1e-12
    %v1702 = vmax.f32 %v1670, 1e-12
    %v1703 = vmax.f32 %v1671, 1e-12
    %v1704 = vmax.f32 %v1672, 1e-12
    %v1705 = vmax.f32 %v1673, 1e-12
    %v1706 = vmax.f32 %v1674, 1e-12
    %v1707 = vmax.f32 %v1675, 1e-12
    %v1708 = vmax.f32 %v1676, 1e-12
    %v1709 = vmax.f32 %v1677, 1e-12
    %v1710 = vmax.f32 %v1678, 1e-12
    %v1711 = vmax.f32 %v1679, 1e-12
    %v1712 = vmax.f32 %v1680, 1e-12
    %v1713 = vmax.f32 %v1681, 1e-12
    %v1714 = vmax.f32 %v1682, 1e-12
    %v1715 = vmax.f32 %v1683, 1e-12
    %v1716 = vmax.f32 %v1684, 1e-12
    %v1717 = vmax.f32 %v1685, 1e-12
    %v1718 = vrsqrt.pop %v1686
    %v1719 = vmul.f32 %v1686, %v1718
    %vm1720 = vcmp.eq.f32.partialorder %v1686, inf
    %v1721 = vsel %vm1720, %v1686, %v1719
    %vm1722 = vcmp.eq.f32.partialorder %v1686, 0.0
    %v1723 = vand.u32 %v1686, 2147483648
    %v1724 = vsel %vm1722, %v1723, %v1721
    %v1725 = vrsqrt.pop %v1687
    %v1726 = vmul.f32 %v1687, %v1725
    %vm1727 = vcmp.eq.f32.partialorder %v1687, inf
    %v1728 = vsel %vm1727, %v1687, %v1726
    %vm1729 = vcmp.eq.f32.partialorder %v1687, 0.0
    %v1730 = vand.u32 %v1687, 2147483648
    %v1731 = vsel %vm1729, %v1730, %v1728
    %v1732 = vrsqrt.pop %v1688
    %v1733 = vmul.f32 %v1688, %v1732
    %vm1734 = vcmp.eq.f32.partialorder %v1688, inf
    %v1735 = vsel %vm1734, %v1688, %v1733
    %vm1736 = vcmp.eq.f32.partialorder %v1688, 0.0
    %v1737 = vand.u32 %v1688, 2147483648
    %v1738 = vsel %vm1736, %v1737, %v1735
    %v1739 = vrsqrt.pop %v1689
    %v1740 = vmul.f32 %v1689, %v1739
    %vm1741 = vcmp.eq.f32.partialorder %v1689, inf
    %v1742 = vsel %vm1741, %v1689, %v1740
    %vm1743 = vcmp.eq.f32.partialorder %v1689, 0.0
    %v1744 = vand.u32 %v1689, 2147483648
    %v1745 = vsel %vm1743, %v1744, %v1742
    %v1746 = vrsqrt.pop %v1690
    %v1747 = vmul.f32 %v1690, %v1746
    %vm1748 = vcmp.eq.f32.partialorder %v1690, inf
    %v1749 = vsel %vm1748, %v1690, %v1747
    %vm1750 = vcmp.eq.f32.partialorder %v1690, 0.0
    %v1751 = vand.u32 %v1690, 2147483648
    %v1752 = vsel %vm1750, %v1751, %v1749
    %v1753 = vrsqrt.pop %v1691
    %v1754 = vmul.f32 %v1691, %v1753
    %vm1755 = vcmp.eq.f32.partialorder %v1691, inf
    %v1756 = vsel %vm1755, %v1691, %v1754
    %vm1757 = vcmp.eq.f32.partialorder %v1691, 0.0
    %v1758 = vand.u32 %v1691, 2147483648
    %v1759 = vsel %vm1757, %v1758, %v1756
    %v1760 = vrsqrt.pop %v1692
    %v1761 = vmul.f32 %v1692, %v1760
    %vm1762 = vcmp.eq.f32.partialorder %v1692, inf
    %v1763 = vsel %vm1762, %v1692, %v1761
    %vm1764 = vcmp.eq.f32.partialorder %v1692, 0.0
    %v1765 = vand.u32 %v1692, 2147483648
    %v1766 = vsel %vm1764, %v1765, %v1763
    %v1767 = vrsqrt.pop %v1693
    %v1768 = vmul.f32 %v1693, %v1767
    %vm1769 = vcmp.eq.f32.partialorder %v1693, inf
    %v1770 = vsel %vm1769, %v1693, %v1768
    %vm1771 = vcmp.eq.f32.partialorder %v1693, 0.0
    %v1772 = vand.u32 %v1693, 2147483648
    %v1773 = vsel %vm1771, %v1772, %v1770
    %v1774 = vrsqrt.pop %v1694
    %v1775 = vmul.f32 %v1694, %v1774
    %vm1776 = vcmp.eq.f32.partialorder %v1694, inf
    %v1777 = vsel %vm1776, %v1694, %v1775
    %vm1778 = vcmp.eq.f32.partialorder %v1694, 0.0
    %v1779 = vand.u32 %v1694, 2147483648
    %v1780 = vsel %vm1778, %v1779, %v1777
    %v1781 = vrsqrt.pop %v1695
    %v1782 = vmul.f32 %v1695, %v1781
    %vm1783 = vcmp.eq.f32.partialorder %v1695, inf
    %v1784 = vsel %vm1783, %v1695, %v1782
    %vm1785 = vcmp.eq.f32.partialorder %v1695, 0.0
    %v1786 = vand.u32 %v1695, 2147483648
    %v1787 = vsel %vm1785, %v1786, %v1784
    %v1788 = vrsqrt.pop %v1696
    %v1789 = vmul.f32 %v1696, %v1788
    %vm1790 = vcmp.eq.f32.partialorder %v1696, inf
    %v1791 = vsel %vm1790, %v1696, %v1789
    %vm1792 = vcmp.eq.f32.partialorder %v1696, 0.0
    %v1793 = vand.u32 %v1696, 2147483648
    %v1794 = vsel %vm1792, %v1793, %v1791
    %v1795 = vrsqrt.pop %v1697
    %v1796 = vmul.f32 %v1697, %v1795
    %vm1797 = vcmp.eq.f32.partialorder %v1697, inf
    %v1798 = vsel %vm1797, %v1697, %v1796
    %vm1799 = vcmp.eq.f32.partialorder %v1697, 0.0
    %v1800 = vand.u32 %v1697, 2147483648
    %v1801 = vsel %vm1799, %v1800, %v1798
    %v1802 = vrsqrt.pop %v1698
    %v1803 = vmul.f32 %v1698, %v1802
    %vm1804 = vcmp.eq.f32.partialorder %v1698, inf
    %v1805 = vsel %vm1804, %v1698, %v1803
    %vm1806 = vcmp.eq.f32.partialorder %v1698, 0.0
    %v1807 = vand.u32 %v1698, 2147483648
    %v1808 = vsel %vm1806, %v1807, %v1805
    %v1809 = vrsqrt.pop %v1699
    %v1810 = vmul.f32 %v1699, %v1809
    %vm1811 = vcmp.eq.f32.partialorder %v1699, inf
    %v1812 = vsel %vm1811, %v1699, %v1810
    %vm1813 = vcmp.eq.f32.partialorder %v1699, 0.0
    %v1814 = vand.u32 %v1699, 2147483648
    %v1815 = vsel %vm1813, %v1814, %v1812
    %v1816 = vrsqrt.pop %v1700
    %v1817 = vmul.f32 %v1700, %v1816
    %vm1818 = vcmp.eq.f32.partialorder %v1700, inf
    %v1819 = vsel %vm1818, %v1700, %v1817
    %vm1820 = vcmp.eq.f32.partialorder %v1700, 0.0
    %v1821 = vand.u32 %v1700, 2147483648
    %v1822 = vsel %vm1820, %v1821, %v1819
    %v1823 = vrsqrt.pop %v1701
    %v1824 = vmul.f32 %v1701, %v1823
    %vm1825 = vcmp.eq.f32.partialorder %v1701, inf
    %v1826 = vsel %vm1825, %v1701, %v1824
    %vm1827 = vcmp.eq.f32.partialorder %v1701, 0.0
    %v1828 = vand.u32 %v1701, 2147483648
    %v1829 = vsel %vm1827, %v1828, %v1826
    %v1830 = vrsqrt.pop %v1702
    %v1831 = vmul.f32 %v1702, %v1830
    %vm1832 = vcmp.eq.f32.partialorder %v1702, inf
    %v1833 = vsel %vm1832, %v1702, %v1831
    %vm1834 = vcmp.eq.f32.partialorder %v1702, 0.0
    %v1835 = vand.u32 %v1702, 2147483648
    %v1836 = vsel %vm1834, %v1835, %v1833
    %v1837 = vrsqrt.pop %v1703
    %v1838 = vmul.f32 %v1703, %v1837
    %vm1839 = vcmp.eq.f32.partialorder %v1703, inf
    %v1840 = vsel %vm1839, %v1703, %v1838
    %vm1841 = vcmp.eq.f32.partialorder %v1703, 0.0
    %v1842 = vand.u32 %v1703, 2147483648
    %v1843 = vsel %vm1841, %v1842, %v1840
    %v1844 = vrsqrt.pop %v1704
    %v1845 = vmul.f32 %v1704, %v1844
    %vm1846 = vcmp.eq.f32.partialorder %v1704, inf
    %v1847 = vsel %vm1846, %v1704, %v1845
    %vm1848 = vcmp.eq.f32.partialorder %v1704, 0.0
    %v1849 = vand.u32 %v1704, 2147483648
    %v1850 = vsel %vm1848, %v1849, %v1847
    %v1851 = vrsqrt.pop %v1705
    %v1852 = vmul.f32 %v1705, %v1851
    %vm1853 = vcmp.eq.f32.partialorder %v1705, inf
    %v1854 = vsel %vm1853, %v1705, %v1852
    %vm1855 = vcmp.eq.f32.partialorder %v1705, 0.0
    %v1856 = vand.u32 %v1705, 2147483648
    %v1857 = vsel %vm1855, %v1856, %v1854
    %v1858 = vrsqrt.pop %v1706
    %v1859 = vmul.f32 %v1706, %v1858
    %vm1860 = vcmp.eq.f32.partialorder %v1706, inf
    %v1861 = vsel %vm1860, %v1706, %v1859
    %vm1862 = vcmp.eq.f32.partialorder %v1706, 0.0
    %v1863 = vand.u32 %v1706, 2147483648
    %v1864 = vsel %vm1862, %v1863, %v1861
    %v1865 = vrsqrt.pop %v1707
    %v1866 = vmul.f32 %v1707, %v1865
    %vm1867 = vcmp.eq.f32.partialorder %v1707, inf
    %v1868 = vsel %vm1867, %v1707, %v1866
    %vm1869 = vcmp.eq.f32.partialorder %v1707, 0.0
    %v1870 = vand.u32 %v1707, 2147483648
    %v1871 = vsel %vm1869, %v1870, %v1868
    %v1872 = vrsqrt.pop %v1708
    %v1873 = vmul.f32 %v1708, %v1872
    %vm1874 = vcmp.eq.f32.partialorder %v1708, inf
    %v1875 = vsel %vm1874, %v1708, %v1873
    %vm1876 = vcmp.eq.f32.partialorder %v1708, 0.0
    %v1877 = vand.u32 %v1708, 2147483648
    %v1878 = vsel %vm1876, %v1877, %v1875
    %v1879 = vrsqrt.pop %v1709
    %v1880 = vmul.f32 %v1709, %v1879
    %vm1881 = vcmp.eq.f32.partialorder %v1709, inf
    %v1882 = vsel %vm1881, %v1709, %v1880
    %vm1883 = vcmp.eq.f32.partialorder %v1709, 0.0
    %v1884 = vand.u32 %v1709, 2147483648
    %v1885 = vsel %vm1883, %v1884, %v1882
    %v1886 = vrsqrt.pop %v1710
    %v1887 = vmul.f32 %v1710, %v1886
    %vm1888 = vcmp.eq.f32.partialorder %v1710, inf
    %v1889 = vsel %vm1888, %v1710, %v1887
    %vm1890 = vcmp.eq.f32.partialorder %v1710, 0.0
    %v1891 = vand.u32 %v1710, 2147483648
    %v1892 = vsel %vm1890, %v1891, %v1889
    %v1893 = vrsqrt.pop %v1711
    %v1894 = vmul.f32 %v1711, %v1893
    %vm1895 = vcmp.eq.f32.partialorder %v1711, inf
    %v1896 = vsel %vm1895, %v1711, %v1894
    %vm1897 = vcmp.eq.f32.partialorder %v1711, 0.0
    %v1898 = vand.u32 %v1711, 2147483648
    %v1899 = vsel %vm1897, %v1898, %v1896
    %v1900 = vrsqrt.pop %v1712
    %v1901 = vmul.f32 %v1712, %v1900
    %vm1902 = vcmp.eq.f32.partialorder %v1712, inf
    %v1903 = vsel %vm1902, %v1712, %v1901
    %vm1904 = vcmp.eq.f32.partialorder %v1712, 0.0
    %v1905 = vand.u32 %v1712, 2147483648
    %v1906 = vsel %vm1904, %v1905, %v1903
    %v1907 = vrsqrt.pop %v1713
    %v1908 = vmul.f32 %v1713, %v1907
    %vm1909 = vcmp.eq.f32.partialorder %v1713, inf
    %v1910 = vsel %vm1909, %v1713, %v1908
    %vm1911 = vcmp.eq.f32.partialorder %v1713, 0.0
    %v1912 = vand.u32 %v1713, 2147483648
    %v1913 = vsel %vm1911, %v1912, %v1910
    %v1914 = vrsqrt.pop %v1714
    %v1915 = vmul.f32 %v1714, %v1914
    %vm1916 = vcmp.eq.f32.partialorder %v1714, inf
    %v1917 = vsel %vm1916, %v1714, %v1915
    %vm1918 = vcmp.eq.f32.partialorder %v1714, 0.0
    %v1919 = vand.u32 %v1714, 2147483648
    %v1920 = vsel %vm1918, %v1919, %v1917
    %v1921 = vrsqrt.pop %v1715
    %v1922 = vmul.f32 %v1715, %v1921
    %vm1923 = vcmp.eq.f32.partialorder %v1715, inf
    %v1924 = vsel %vm1923, %v1715, %v1922
    %vm1925 = vcmp.eq.f32.partialorder %v1715, 0.0
    %v1926 = vand.u32 %v1715, 2147483648
    %v1927 = vsel %vm1925, %v1926, %v1924
    %v1928 = vrsqrt.pop %v1716
    %v1929 = vmul.f32 %v1716, %v1928
    %vm1930 = vcmp.eq.f32.partialorder %v1716, inf
    %v1931 = vsel %vm1930, %v1716, %v1929
    %vm1932 = vcmp.eq.f32.partialorder %v1716, 0.0
    %v1933 = vand.u32 %v1716, 2147483648
    %v1934 = vsel %vm1932, %v1933, %v1931
    %v1935 = vrsqrt.pop %v1717
    %v1936 = vmul.f32 %v1717, %v1935
    %vm1937 = vcmp.eq.f32.partialorder %v1717, inf
    %v1938 = vsel %vm1937, %v1717, %v1936
    %vm1939 = vcmp.eq.f32.partialorder %v1717, 0.0
    %v1940 = vand.u32 %v1717, 2147483648
    %v1941 = vsel %vm1939, %v1940, %v1938
    %v1942 = vsub.f32 %v1404, %v1724
    %v1943 = vsub.f32 %v1411, %v1731
    %v1944 = vsub.f32 %v1418, %v1738
    %v1945 = vsub.f32 %v1425, %v1745
    %v1946 = vsub.f32 %v1432, %v1752
    %v1947 = vsub.f32 %v1439, %v1759
    %v1948 = vsub.f32 %v1446, %v1766
    %v1949 = vsub.f32 %v1453, %v1773
    %v1950 = vsub.f32 %v1460, %v1780
    %v1951 = vsub.f32 %v1467, %v1787
    %v1952 = vsub.f32 %v1474, %v1794
    %v1953 = vsub.f32 %v1481, %v1801
    %v1954 = vsub.f32 %v1488, %v1808
    %v1955 = vsub.f32 %v1495, %v1815
    %v1956 = vsub.f32 %v1502, %v1822
    %v1957 = vsub.f32 %v1509, %v1829
    %v1958 = vsub.f32 %v1516, %v1836
    %v1959 = vsub.f32 %v1523, %v1843
    %v1960 = vsub.f32 %v1530, %v1850
    %v1961 = vsub.f32 %v1537, %v1857
    %v1962 = vsub.f32 %v1544, %v1864
    %v1963 = vsub.f32 %v1551, %v1871
    %v1964 = vsub.f32 %v1558, %v1878
    %v1965 = vsub.f32 %v1565, %v1885
    %v1966 = vsub.f32 %v1572, %v1892
    %v1967 = vsub.f32 %v1579, %v1899
    %v1968 = vsub.f32 %v1586, %v1906
    %v1969 = vsub.f32 %v1593, %v1913
    %v1970 = vsub.f32 %v1600, %v1920
    %v1971 = vsub.f32 %v1607, %v1927
    %v1972 = vsub.f32 %v1614, %v1934
    %v1973 = vsub.f32 %v1621, %v1941
    %v1974 = vadd.f32 %v1942, 0.3
    %v1975 = vadd.f32 %v1943, 0.3
    %v1976 = vadd.f32 %v1944, 0.3
    %v1977 = vadd.f32 %v1945, 0.3
    %v1978 = vadd.f32 %v1946, 0.3
    %v1979 = vadd.f32 %v1947, 0.3
    %v1980 = vadd.f32 %v1948, 0.3
    %v1981 = vadd.f32 %v1949, 0.3
    %v1982 = vadd.f32 %v1950, 0.3
    %v1983 = vadd.f32 %v1951, 0.3
    %v1984 = vadd.f32 %v1952, 0.3
    %v1985 = vadd.f32 %v1953, 0.3
    %v1986 = vadd.f32 %v1954, 0.3
    %v1987 = vadd.f32 %v1955, 0.3
    %v1988 = vadd.f32 %v1956, 0.3
    %v1989 = vadd.f32 %v1957, 0.3
    %v1990 = vadd.f32 %v1958, 0.3
    %v1991 = vadd.f32 %v1959, 0.3
    %v1992 = vadd.f32 %v1960, 0.3
    %v1993 = vadd.f32 %v1961, 0.3
    %v1994 = vadd.f32 %v1962, 0.3
    %v1995 = vadd.f32 %v1963, 0.3
    %v1996 = vadd.f32 %v1964, 0.3
    %v1997 = vadd.f32 %v1965, 0.3
    %v1998 = vadd.f32 %v1966, 0.3
    %v1999 = vadd.f32 %v1967, 0.3
    %v2000 = vadd.f32 %v1968, 0.3
    %v2001 = vadd.f32 %v1969, 0.3
    %v2002 = vadd.f32 %v1970, 0.3
    %v2003 = vadd.f32 %v1971, 0.3
    %v2004 = vadd.f32 %v1972, 0.3
    %v2005 = vadd.f32 %v1973, 0.3
    %v2006 = vmax.f32 %v1974, 0.0
    %v2007 = vmax.f32 %v1975, 0.0
    %v2008 = vmax.f32 %v1976, 0.0
    %v2009 = vmax.f32 %v1977, 0.0
    %v2010 = vmax.f32 %v1978, 0.0
    %v2011 = vmax.f32 %v1979, 0.0
    %v2012 = vmax.f32 %v1980, 0.0
    %v2013 = vmax.f32 %v1981, 0.0
    %v2014 = vmax.f32 %v1982, 0.0
    %v2015 = vmax.f32 %v1983, 0.0
    %v2016 = vmax.f32 %v1984, 0.0
    %v2017 = vmax.f32 %v1985, 0.0
    %v2018 = vmax.f32 %v1986, 0.0
    %v2019 = vmax.f32 %v1987, 0.0
    %v2020 = vmax.f32 %v1988, 0.0
    %v2021 = vmax.f32 %v1989, 0.0
    %v2022 = vmax.f32 %v1990, 0.0
    %v2023 = vmax.f32 %v1991, 0.0
    %v2024 = vmax.f32 %v1992, 0.0
    %v2025 = vmax.f32 %v1993, 0.0
    %v2026 = vmax.f32 %v1994, 0.0
    %v2027 = vmax.f32 %v1995, 0.0
    %v2028 = vmax.f32 %v1996, 0.0
    %v2029 = vmax.f32 %v1997, 0.0
    %v2030 = vmax.f32 %v1998, 0.0
    %v2031 = vmax.f32 %v1999, 0.0
    %v2032 = vmax.f32 %v2000, 0.0
    %v2033 = vmax.f32 %v2001, 0.0
    %v2034 = vmax.f32 %v2002, 0.0
    %v2035 = vmax.f32 %v2003, 0.0
    %v2036 = vmax.f32 %v2004, 0.0
    %v2037 = vmax.f32 %v2005, 0.0
    %2038 = vst.msk [vmem:[%s6] sm:$0xff] %vm978, %v2006
    %2039 = vst.msk [vmem:[%s6 + $0x8] sm:$0xff] %vm978, %v2007
    %2040 = vst.msk [vmem:[%s6 + $0x10] sm:$0xff] %vm978, %v2008
    %2041 = vst.msk [vmem:[%s6 + $0x18] sm:$0xff] %vm978, %v2009
    %2042 = vst.msk [vmem:[%s6 + $0x20] sm:$0xff] %vm978, %v2010
    %2043 = vst.msk [vmem:[%s6 + $0x28] sm:$0xff] %vm978, %v2011
    %2044 = vst.msk [vmem:[%s6 + $0x30] sm:$0xff] %vm978, %v2012
    %2045 = vst.msk [vmem:[%s6 + $0x38] sm:$0xff] %vm978, %v2013
    %2046 = vst.msk [vmem:[%s6 + $0x40] sm:$0xff] %vm978, %v2014
    %2047 = vst.msk [vmem:[%s6 + $0x48] sm:$0xff] %vm978, %v2015
    %2048 = vst.msk [vmem:[%s6 + $0x50] sm:$0xff] %vm978, %v2016
    %2049 = vst.msk [vmem:[%s6 + $0x58] sm:$0xff] %vm978, %v2017
    %2050 = vst.msk [vmem:[%s6 + $0x60] sm:$0xff] %vm978, %v2018
    %2051 = vst.msk [vmem:[%s6 + $0x68] sm:$0xff] %vm978, %v2019
    %2052 = vst.msk [vmem:[%s6 + $0x70] sm:$0xff] %vm978, %v2020
    %2053 = vst.msk [vmem:[%s6 + $0x78] sm:$0xff] %vm978, %v2021
    %2054 = vst.msk [vmem:[%s6 + $0x80] sm:$0xff] %vm978, %v2022
    %2055 = vst.msk [vmem:[%s6 + $0x88] sm:$0xff] %vm978, %v2023
    %2056 = vst.msk [vmem:[%s6 + $0x90] sm:$0xff] %vm978, %v2024
    %2057 = vst.msk [vmem:[%s6 + $0x98] sm:$0xff] %vm978, %v2025
    %2058 = vst.msk [vmem:[%s6 + $0xa0] sm:$0xff] %vm978, %v2026
    %2059 = vst.msk [vmem:[%s6 + $0xa8] sm:$0xff] %vm978, %v2027
    %2060 = vst.msk [vmem:[%s6 + $0xb0] sm:$0xff] %vm978, %v2028
    %2061 = vst.msk [vmem:[%s6 + $0xb8] sm:$0xff] %vm978, %v2029
    %2062 = vst.msk [vmem:[%s6 + $0xc0] sm:$0xff] %vm978, %v2030
    %2063 = vst.msk [vmem:[%s6 + $0xc8] sm:$0xff] %vm978, %v2031
    %2064 = vst.msk [vmem:[%s6 + $0xd0] sm:$0xff] %vm978, %v2032
    %2065 = vst.msk [vmem:[%s6 + $0xd8] sm:$0xff] %vm978, %v2033
    %2066 = vst.msk [vmem:[%s6 + $0xe0] sm:$0xff] %vm978, %v2034
    %2067 = vst.msk [vmem:[%s6 + $0xe8] sm:$0xff] %vm978, %v2035
    %2068 = vst.msk [vmem:[%s6 + $0xf0] sm:$0xff] %vm978, %v2036
    %2069 = vst.msk [vmem:[%s6 + $0xf8] sm:$0xff] %vm978, %v2037
  $region33: #{tpu_custom_call.1} parent=0 // pred_fallthru
    _
  // Predicated region
  $region34: #{tpu_custom_call.1} parent=0 // pred_check
    _
  $region35: #{tpu_custom_call.1} parent=0 // pred_check_branch
    %2071 = sbr.rel (0) target = $region37
  $region36: #{tpu_custom_call.1} parent=0 // pred_region
    _
  $region37: #{tpu_custom_call.1} parent=0 // pred_fallthru
    _
  // Predicated region
  $region38: #{tpu_custom_call.1} parent=0 // pred_check
    _
  $region39: #{tpu_custom_call.1} parent=0 // pred_check_branch
    %2073 = sbr.rel (0) target = $region41
  $region40: #{tpu_custom_call.1} parent=0 // pred_region
    _
  $region41: #{tpu_custom_call.1} parent=0 // pred_fallthru
    _

</llo_original>
